<compile_context>
chip_gen: v7x
topology: tpu7x:2x2x1
jax: 0.10.0
libtpu: 0.0.40
codegen_flags: <defaults>
</compile_context>

<pallas_src>
import functools
import math

import jax
import jax.numpy as jnp
from jax import lax
from jax.experimental import pallas as pl
from jax.experimental.pallas import tpu as pltpu


# ---------------------------------------------------------------------------
# Small numerics helpers (used identically inside kernels and in the JAX reference)
# ---------------------------------------------------------------------------

def _softmax_last(x):
    m = jnp.max(x, axis=-1, keepdims=True)
    e = jnp.exp(x - m)
    return e / jnp.sum(e, axis=-1, keepdims=True)


def _sigmoid(x):
    return 1.0 / (1.0 + jnp.exp(-x))


# ---------------------------------------------------------------------------
# Pallas kernels
# ---------------------------------------------------------------------------

def _linear_kernel(x_ref, w_ref, b_ref, o_ref):
    # o = x @ w + b   (w stored [in, out]; b stored [1, out] -> lane-dense output)
    o_ref[...] = (
        jnp.dot(x_ref[...], w_ref[...], preferred_element_type=jnp.float32)
        + b_ref[...]
    )


def _lstm_cell_kernel(xp_ref, h_ref, c_ref, whh_ref, h_out_ref, c_out_ref):
    # xp already holds x_t @ W_ih + (b_ih + b_hh); add the recurrent projection here.
    gates = xp_ref[...] + jnp.dot(
        h_ref[...], whh_ref[...], preferred_element_type=jnp.float32
    )
    hidden = h_ref.shape[-1]
    i = _sigmoid(gates[:, 0 * hidden:1 * hidden])
    f = _sigmoid(gates[:, 1 * hidden:2 * hidden])
    g = jnp.tanh(gates[:, 2 * hidden:3 * hidden])
    o = _sigmoid(gates[:, 3 * hidden:4 * hidden])
    c_new = f * c_ref[...] + i * g
    h_out_ref[...] = o * jnp.tanh(c_new)
    c_out_ref[...] = c_new


def _attention_kernel(q_ref, k_ref, v_ref, o_ref, *, inv_scale):
    # One (batch*head) slice per grid step: q/k/v blocks are [1, S, depth].
    q = q_ref[0]
    k = k_ref[0]
    v = v_ref[0]
    s = lax.dot_general(
        q, k, (((1,), (1,)), ((), ())), preferred_element_type=jnp.float32
    ) * inv_scale
    p = _softmax_last(s)
    o_ref[0] = jnp.dot(p, v, preferred_element_type=jnp.float32)


def _reweight_kernel(a_ref, h_ref, o_ref):
    # alpha = softmax(attn2 @ hidden^T); out = alpha @ hidden
    a = a_ref[...]
    h = h_ref[...]
    s = lax.dot_general(
        a, h, (((1,), (1,)), ((), ())), preferred_element_type=jnp.float32
    )
    p = _softmax_last(s)
    o_ref[...] = jnp.dot(p, h, preferred_element_type=jnp.float32)


def _head_kernel(fine_ref, coarse_ref, lam_ref, o_ref):
    z = fine_ref[...] + coarse_ref[...] * lam_ref[...]
    o_ref[...] = _softmax_last(z)


# ---------------------------------------------------------------------------
# Pallas op wrappers (full-array blocks: shapes are small, one grid step each)
# ---------------------------------------------------------------------------

def linear_pallas(x, w, b):
    m = x.shape[0]
    n = w.shape[1]
    return pl.pallas_call(
        _linear_kernel,
        out_shape=jax.ShapeDtypeStruct((m, n), jnp.float32),
    )(x, w, b)


def lstm_cell_pallas(xp, h, c, w_hh):
    shp = jax.ShapeDtypeStruct(h.shape, jnp.float32)
    return pl.pallas_call(
        _lstm_cell_kernel,
        out_shape=(shp, shp),
    )(xp, h, c, w_hh)


def attention_pallas(q, k, v):
    bh, s, d = q.shape
    kernel = functools.partial(_attention_kernel, inv_scale=1.0 / math.sqrt(d))
    spec = pl.BlockSpec((1, s, d), lambda i: (i, 0, 0))
    return pl.pallas_call(
        kernel,
        out_shape=jax.ShapeDtypeStruct((bh, s, d), jnp.float32),
        grid=(bh,),
        in_specs=[spec, spec, spec],
        out_specs=spec,
        compiler_params=pltpu.CompilerParams(dimension_semantics=("parallel",)),
    )(q, k, v)


def reweight_pallas(attn2, hidden):
    return pl.pallas_call(
        _reweight_kernel,
        out_shape=jax.ShapeDtypeStruct(hidden.shape, jnp.float32),
    )(attn2, hidden)


def head_pallas(fine, coarse, lam):
    return pl.pallas_call(
        _head_kernel,
        out_shape=jax.ShapeDtypeStruct(fine.shape, jnp.float32),
    )(fine, coarse, lam)


# ---------------------------------------------------------------------------
# Pure-JAX reference ops (same formulas, HIGHEST matmul precision) for checking
# ---------------------------------------------------------------------------

_HI = lax.Precision.HIGHEST


def linear_ref(x, w, b):
    return jnp.dot(x, w, precision=_HI) + b


def lstm_cell_ref(xp, h, c, w_hh):
    gates = xp + jnp.dot(h, w_hh, precision=_HI)
    hidden = h.shape[-1]
    i = _sigmoid(gates[:, 0 * hidden:1 * hidden])
    f = _sigmoid(gates[:, 1 * hidden:2 * hidden])
    g = jnp.tanh(gates[:, 2 * hidden:3 * hidden])
    o = _sigmoid(gates[:, 3 * hidden:4 * hidden])
    c_new = f * c + i * g
    return o * jnp.tanh(c_new), c_new


def attention_ref(q, k, v):
    d = q.shape[-1]
    s = jnp.einsum("bqd,bkd->bqk", q, k, precision=_HI) / math.sqrt(d)
    return jnp.einsum("bqk,bkd->bqd", _softmax_last(s), v, precision=_HI)


def reweight_ref(attn2, hidden):
    s = jnp.dot(attn2, hidden.T, precision=_HI)
    return jnp.dot(_softmax_last(s), hidden, precision=_HI)


def head_ref(fine, coarse, lam):
    return _softmax_last(fine + coarse * lam)


PALLAS_OPS = dict(linear=linear_pallas, lstm_cell=lstm_cell_pallas,
                  attention=attention_pallas, reweight=reweight_pallas,
                  head=head_pallas)
REF_OPS = dict(linear=linear_ref, lstm_cell=lstm_cell_ref,
               attention=attention_ref, reweight=reweight_ref, head=head_ref)


# ---------------------------------------------------------------------------
# Model forward (mirrors the PyTorch HLSN / HLSL / MultiHeadAttn / HLstm_Encoder)
# ---------------------------------------------------------------------------

def _lstm_direction(dp, x, reverse, ops):
    """Single-direction LSTM over x: [B, T, D] -> [B, T, H]."""
    b, t, d = x.shape
    h_dim = dp["w_hh"].shape[0]
    # Input projection for all timesteps at once (one Pallas matmul).
    xp = ops["linear"](x.reshape(b * t, d), dp["w_ih"], dp["b"]).reshape(b, t, 4 * h_dim)
    if reverse:
        xp = xp[:, ::-1, :]
    xp = jnp.swapaxes(xp, 0, 1)  # [T, B, 4H]

    def step(carry, xp_t):
        h, c = carry
        h, c = ops["lstm_cell"](xp_t, h, c, dp["w_hh"])
        return (h, c), h

    init = (jnp.zeros((b, h_dim), jnp.float32), jnp.zeros((b, h_dim), jnp.float32))
    _, hs = lax.scan(step, init, xp)
    hs = jnp.swapaxes(hs, 0, 1)  # [B, T, H]
    if reverse:
        hs = hs[:, ::-1, :]
    return hs


def _bi_lstm(lp, x, ops):
    """2-layer bidirectional LSTM, batch_first (eval mode)."""
    out = x
    for layer in lp:
        fwd = _lstm_direction(layer["fwd"], out, reverse=False, ops=ops)
        bwd = _lstm_direction(layer["bwd"], out, reverse=True, ops=ops)
        out = jnp.concatenate([fwd, bwd], axis=-1)
    return out


def _multi_head_attn(ap, q, k, v, num_heads, ops):
    b, s, h2 = q.shape
    depth = h2 // num_heads

    def proj(x, w, bias):
        return ops["linear"](x.reshape(b * s, h2), w, bias).reshape(b, s, h2)

    qp = proj(q, ap["wq_w"], ap["wq_b"])
    kp = proj(k, ap["wk_w"], ap["wk_b"])
    vp = proj(v, ap["wv_w"], ap["wv_b"])

    def split_heads(x):
        return x.reshape(b, s, num_heads, depth).transpose(0, 2, 1, 3).reshape(
            b * num_heads, s, depth)

    o = ops["attention"](split_heads(qp), split_heads(kp), split_heads(vp))
    o = o.reshape(b, num_heads, s, depth).transpose(0, 2, 1, 3).reshape(b * s, h2)
    return ops["linear"](o, ap["fc_w"], ap["fc_b"]).reshape(b, s, h2)


def _hlsl(p, hidden, coarse, fine, num_heads, ops):
    # hidden / coarse / fine: [1, B, H2]
    ctx = _bi_lstm(p["ctx_lstm"], hidden, ops)
    attn1 = _multi_head_attn(p["attn"], ctx, coarse, coarse, num_heads, ops)
    attn2 = _multi_head_attn(p["attn"], attn1, fine, fine, num_heads, ops)
    re_weight = ops["reweight"](attn2[0], hidden[0])[None]        # [1, B, H2]
    cat = jnp.concatenate([re_weight, ctx, attn2], axis=2)        # [1, B, 6*hidden]
    return ops["linear"](cat[0], p["concat_w"], p["concat_b"])[None]


def hlsn_forward(params, x, labels, *, num_heads, ops):
    """x: int32 [B, T]; labels: int32 [B] -> [B, output_dim] softmax probs."""
    _, t = x.shape
    # TODO(synk): embedding gathers stay as jnp.take (data-dependent gather).
    feats = jnp.take(params["embedding"], x, axis=0)               # [B, T, E]
    hidden_states = _bi_lstm(params["encoder_lstm"], feats, ops)   # [B, T, H2]
    hn = (jnp.sum(hidden_states, axis=1) / t)[None]                # [1, B, H2]
    coarse = jnp.take(params["coarse_embedding"], labels, axis=0)[None]
    fine = jnp.take(params["fine_embedding"], labels, axis=0)[None]

    def hlsl_step(carry, stack_params):
        return _hlsl(stack_params, carry, coarse, fine, num_heads, ops), None

    hn, _ = lax.scan(hlsl_step, hn, params["hlsl"])                # 5 HLSL stacks
    hn = hn[0]                                                     # [B, H2]
    coarse_out = ops["linear"](hn, params["coarse_fc_w"], params["coarse_fc_b"])
    fine_out = ops["linear"](hn, params["fine_fc_w"], params["fine_fc_b"])
    return ops["head"](fine_out, coarse_out, params["lam"])


# ---------------------------------------------------------------------------
# Parameter construction (deterministic; weights stored in [in, out] layout)
# ---------------------------------------------------------------------------

def _dense_init(key, fan_in, fan_out):
    kw, kb = jax.random.split(key)
    bound = 1.0 / math.sqrt(fan_in)
    w = jax.random.uniform(kw, (fan_in, fan_out), jnp.float32, -bound, bound)
    b = jax.random.uniform(kb, (1, fan_out), jnp.float32, -bound, bound)
    return w, b


def _lstm_dir_init(key, in_dim, hidden):
    k1, k2, k3 = jax.random.split(key, 3)
    bound = 1.0 / math.sqrt(hidden)
    return {
        "w_ih": jax.random.uniform(k1, (in_dim, 4 * hidden), jnp.float32, -bound, bound),
        "w_hh": jax.random.uniform(k2, (hidden, 4 * hidden), jnp.float32, -bound, bound),
        "b": jax.random.uniform(k3, (1, 4 * hidden), jnp.float32, -bound, bound),
    }


def _lstm_init(key, in_dim, hidden, num_layers=2):
    layers = []
    for l in range(num_layers):
        key, kf, kb = jax.random.split(key, 3)
        d_in = in_dim if l == 0 else 2 * hidden
        layers.append({"fwd": _lstm_dir_init(kf, d_in, hidden),
                       "bwd": _lstm_dir_init(kb, d_in, hidden)})
    return tuple(layers)


def _attn_init(key, h2):
    p = {}
    for name, k in zip(("wq", "wk", "wv", "fc"), jax.random.split(key, 4)):
        w, b = _dense_init(k, h2, h2)
        p[name + "_w"], p[name + "_b"] = w, b
    return p


def _hlsl_init(key, hidden):
    h2 = 2 * hidden
    k1, k2, k3 = jax.random.split(key, 3)
    cw, cb = _dense_init(k3, 6 * hidden, h2)
    return {"ctx_lstm": _lstm_init(k1, h2, hidden),
            "attn": _attn_init(k2, h2),
            "concat_w": cw, "concat_b": cb}


def init_hlsn_params(key, *, vocab_size, embed_dim, hidden_dim, output_dim,
                     num_stacks=5):
    h2 = 2 * hidden_dim
    keys = jax.random.split(key, 8)
    stacks = [_hlsl_init(k, hidden_dim) for k in jax.random.split(keys[4], num_stacks)]
    hlsl = jax.tree_util.tree_map(lambda *xs: jnp.stack(xs, axis=0), *stacks)
    c_w, c_b = _dense_init(keys[5], h2, output_dim)
    f_w, f_b = _dense_init(keys[6], h2, output_dim)
    return {
        "embedding": jax.random.normal(keys[0], (vocab_size, embed_dim), jnp.float32),
        "coarse_embedding": jax.random.normal(keys[1], (output_dim, h2), jnp.float32),
        "fine_embedding": jax.random.normal(keys[2], (output_dim, h2), jnp.float32),
        "encoder_lstm": _lstm_init(keys[3], embed_dim, hidden_dim),
        "hlsl": hlsl,
        "coarse_fc_w": c_w, "coarse_fc_b": c_b,
        "fine_fc_w": f_w, "fine_fc_b": f_b,
        "lam": jax.random.uniform(keys[7], (1, 1), jnp.float32, -0.1, 0.1),
    }


# ---------------------------------------------------------------------------
# Demo / self-check
# ---------------------------------------------------------------------------

if __name__ == "__main__":
    batch, max_seq_len = 2, 8
    vocab_size, embed_dim, hidden_dim = 50, 32, 16
    num_heads, output_dim = 4, 4            # (hidden_dim * 2) % num_heads == 0

    key = jax.random.PRNGKey(0)
    kp, kx, kl = jax.random.split(key, 3)
    params = init_hlsn_params(kp, vocab_size=vocab_size, embed_dim=embed_dim,
                              hidden_dim=hidden_dim, output_dim=output_dim)
    x = jax.random.randint(kx, (batch, max_seq_len), 0, vocab_size, dtype=jnp.int32)
    labels = jax.random.randint(kl, (batch,), 0, output_dim, dtype=jnp.int32)

    pallas_fwd = jax.jit(functools.partial(hlsn_forward, num_heads=num_heads,
                                           ops=PALLAS_OPS))
    ref_fwd = jax.jit(functools.partial(hlsn_forward, num_heads=num_heads,
                                        ops=REF_OPS))

    out = jax.block_until_ready(pallas_fwd(params, x, labels))
    ref = jax.block_until_ready(ref_fwd(params, x, labels))

    assert out.shape == (batch, output_dim)
    assert bool(jnp.all(jnp.isfinite(out)))
    assert bool(jnp.allclose(jnp.sum(out, axis=-1), 1.0, atol=1e-4))
    max_diff = float(jnp.max(jnp.abs(out - ref)))
    assert bool(jnp.allclose(out, ref, atol=1e-2, rtol=1e-2)), f"max diff {max_diff}"

    print("KERNEL_OK")
</pallas_src>

<mosaic_0001>
module attributes {stable_mosaic.version = 11 : i64} {
  func.func @_linear_kernel(%arg0: memref<16x32xf32, #tpu.memory_space<vmem>>, %arg1: memref<32x64xf32, #tpu.memory_space<vmem>>, %arg2: memref<1x64xf32, #tpu.memory_space<vmem>>, %arg3: memref<16x64xf32, #tpu.memory_space<vmem>>) attributes {dimension_semantics = [], scalar_prefetch = 0 : i64, scratch_operands = 0 : i64, tpu.core_type = #tpu.core_type<tc>} {
    %c0 = arith.constant 0 : index
    %c0_0 = arith.constant 0 : index
    %0 = vector.load %arg0[%c0, %c0_0] : memref<16x32xf32, #tpu.memory_space<vmem>>, vector<16x32xf32>
    %c0_1 = arith.constant 0 : index
    %c0_2 = arith.constant 0 : index
    %1 = vector.load %arg1[%c0_1, %c0_2] : memref<32x64xf32, #tpu.memory_space<vmem>>, vector<32x64xf32>
    %cst = arith.constant dense<0.000000e+00> : vector<16x64xf32>
    %2 = tpu.matmul %0, %1, %cst {dimension_numbers = #tpu.dot_dimension_numbers<[1], [0], [0], [1], [0, 0, 1, 1], [], []>} : vector<16x32xf32>, vector<32x64xf32>, vector<16x64xf32> -> vector<16x64xf32>
    %c0_3 = arith.constant 0 : index
    %c0_4 = arith.constant 0 : index
    %3 = vector.load %arg2[%c0_3, %c0_4] : memref<1x64xf32, #tpu.memory_space<vmem>>, vector<1x64xf32>
    %4 = vector.broadcast %3 : vector<1x64xf32> to vector<16x64xf32>
    %5 = arith.addf %2, %4 : vector<16x64xf32>
    %c0_5 = arith.constant 0 : index
    %c0_6 = arith.constant 0 : index
    %6 = vector.load %arg3[%c0_5, %c0_6] : memref<16x64xf32, #tpu.memory_space<vmem>>, vector<16x64xf32>
    tpu.vector_store %arg3[%c0_5, %c0_6], %5 {strides = array<i32>} : memref<16x64xf32, #tpu.memory_space<vmem>>, vector<16x64xf32>,
    return
  }
}

module attributes {stable_mosaic.version = 11 : i64} {
  func.func @_lstm_cell_kernel(%arg0: memref<2x64xf32, #tpu.memory_space<vmem>>, %arg1: memref<2x16xf32, #tpu.memory_space<vmem>>, %arg2: memref<2x16xf32, #tpu.memory_space<vmem>>, %arg3: memref<16x64xf32, #tpu.memory_space<vmem>>, %arg4: memref<2x16xf32, #tpu.memory_space<vmem>>, %arg5: memref<2x16xf32, #tpu.memory_space<vmem>>) attributes {dimension_semantics = [], scalar_prefetch = 0 : i64, scratch_operands = 0 : i64, tpu.core_type = #tpu.core_type<tc>} {
    %c0 = arith.constant 0 : index
    %c0_0 = arith.constant 0 : index
    %0 = vector.load %arg0[%c0, %c0_0] : memref<2x64xf32, #tpu.memory_space<vmem>>, vector<2x64xf32>
    %c0_1 = arith.constant 0 : index
    %c0_2 = arith.constant 0 : index
    %1 = vector.load %arg1[%c0_1, %c0_2] : memref<2x16xf32, #tpu.memory_space<vmem>>, vector<2x16xf32>
    %c0_3 = arith.constant 0 : index
    %c0_4 = arith.constant 0 : index
    %2 = vector.load %arg3[%c0_3, %c0_4] : memref<16x64xf32, #tpu.memory_space<vmem>>, vector<16x64xf32>
    %cst = arith.constant dense<0.000000e+00> : vector<2x64xf32>
    %3 = tpu.matmul %1, %2, %cst {dimension_numbers = #tpu.dot_dimension_numbers<[1], [0], [0], [1], [0, 0, 1, 1], [], []>} : vector<2x16xf32>, vector<16x64xf32>, vector<2x64xf32> -> vector<2x64xf32>
    %4 = arith.addf %0, %3 : vector<2x64xf32>
    %5 = vector.extract_strided_slice %4 {offsets = [0, 0], sizes = [2, 16], strides = [1, 1]} : vector<2x64xf32> to vector<2x16xf32>
    %cst_5 = arith.constant 0.000000e+00 : f32
    %6 = vector.broadcast %cst_5 : f32 to vector<2x16xf32>
    %7 = arith.subf %6, %5 : vector<2x16xf32>
    %8 = math.exp %7 : vector<2x16xf32>
    %cst_6 = arith.constant 1.000000e+00 : f32
    %9 = vector.broadcast %cst_6 : f32 to vector<2x16xf32>
    %10 = arith.addf %9, %8 : vector<2x16xf32>
    %cst_7 = arith.constant 1.000000e+00 : f32
    %11 = vector.broadcast %cst_7 : f32 to vector<2x16xf32>
    %12 = arith.divf %11, %10 : vector<2x16xf32>
    %13 = vector.extract_strided_slice %4 {offsets = [0, 16], sizes = [2, 16], strides = [1, 1]} : vector<2x64xf32> to vector<2x16xf32>
    %cst_8 = arith.constant 0.000000e+00 : f32
    %14 = vector.broadcast %cst_8 : f32 to vector<2x16xf32>
    %15 = arith.subf %14, %13 : vector<2x16xf32>
    %16 = math.exp %15 : vector<2x16xf32>
    %cst_9 = arith.constant 1.000000e+00 : f32
    %17 = vector.broadcast %cst_9 : f32 to vector<2x16xf32>
    %18 = arith.addf %17, %16 : vector<2x16xf32>
    %cst_10 = arith.constant 1.000000e+00 : f32
    %19 = vector.broadcast %cst_10 : f32 to vector<2x16xf32>
    %20 = arith.divf %19, %18 : vector<2x16xf32>
    %21 = vector.extract_strided_slice %4 {offsets = [0, 32], sizes = [2, 16], strides = [1, 1]} : vector<2x64xf32> to vector<2x16xf32>
    %22 = math.tanh %21 : vector<2x16xf32>
    %23 = vector.extract_strided_slice %4 {offsets = [0, 48], sizes = [2, 16], strides = [1, 1]} : vector<2x64xf32> to vector<2x16xf32>
    %cst_11 = arith.constant 0.000000e+00 : f32
    %24 = vector.broadcast %cst_11 : f32 to vector<2x16xf32>
    %25 = arith.subf %24, %23 : vector<2x16xf32>
    %26 = math.exp %25 : vector<2x16xf32>
    %cst_12 = arith.constant 1.000000e+00 : f32
    %27 = vector.broadcast %cst_12 : f32 to vector<2x16xf32>
    %28 = arith.addf %27, %26 : vector<2x16xf32>
    %cst_13 = arith.constant 1.000000e+00 : f32
    %29 = vector.broadcast %cst_13 : f32 to vector<2x16xf32>
    %30 = arith.divf %29, %28 : vector<2x16xf32>
    %c0_14 = arith.constant 0 : index
    %c0_15 = arith.constant 0 : index
    %31 = vector.load %arg2[%c0_14, %c0_15] : memref<2x16xf32, #tpu.memory_space<vmem>>, vector<2x16xf32>
    %32 = arith.mulf %20, %31 : vector<2x16xf32>
    %33 = arith.mulf %12, %22 : vector<2x16xf32>
    %34 = arith.addf %32, %33 : vector<2x16xf32>
    %35 = math.tanh %34 : vector<2x16xf32>
    %36 = arith.mulf %30, %35 : vector<2x16xf32>
    %c0_16 = arith.constant 0 : index
    %c0_17 = arith.constant 0 : index
    %37 = vector.load %arg4[%c0_16, %c0_17] : memref<2x16xf32, #tpu.memory_space<vmem>>, vector<2x16xf32>
    tpu.vector_store %arg4[%c0_16, %c0_17], %36 {strides = array<i32>} : memref<2x16xf32, #tpu.memory_space<vmem>>, vector<2x16xf32>,
    %c0_18 = arith.constant 0 : index
    %c0_19 = arith.constant 0 : index
    %38 = vector.load %arg5[%c0_18, %c0_19] : memref<2x16xf32, #tpu.memory_space<vmem>>, vector<2x16xf32>
    tpu.vector_store %arg5[%c0_18, %c0_19], %34 {strides = array<i32>} : memref<2x16xf32, #tpu.memory_space<vmem>>, vector<2x16xf32>,
    return
  }
}

module attributes {stable_mosaic.version = 11 : i64} {
  func.func @_linear_kernel(%arg0: memref<2x32xf32, #tpu.memory_space<vmem>>, %arg1: memref<32x64xf32, #tpu.memory_space<vmem>>, %arg2: memref<1x64xf32, #tpu.memory_space<vmem>>, %arg3: memref<2x64xf32, #tpu.memory_space<vmem>>) attributes {dimension_semantics = [], scalar_prefetch = 0 : i64, scratch_operands = 0 : i64, tpu.core_type = #tpu.core_type<tc>} {
    %c0 = arith.constant 0 : index
    %c0_0 = arith.constant 0 : index
    %0 = vector.load %arg0[%c0, %c0_0] : memref<2x32xf32, #tpu.memory_space<vmem>>, vector<2x32xf32>
    %c0_1 = arith.constant 0 : index
    %c0_2 = arith.constant 0 : index
    %1 = vector.load %arg1[%c0_1, %c0_2] : memref<32x64xf32, #tpu.memory_space<vmem>>, vector<32x64xf32>
    %cst = arith.constant dense<0.000000e+00> : vector<2x64xf32>
    %2 = tpu.matmul %0, %1, %cst {dimension_numbers = #tpu.dot_dimension_numbers<[1], [0], [0], [1], [0, 0, 1, 1], [], []>} : vector<2x32xf32>, vector<32x64xf32>, vector<2x64xf32> -> vector<2x64xf32>
    %c0_3 = arith.constant 0 : index
    %c0_4 = arith.constant 0 : index
    %3 = vector.load %arg2[%c0_3, %c0_4] : memref<1x64xf32, #tpu.memory_space<vmem>>, vector<1x64xf32>
    %4 = vector.broadcast %3 : vector<1x64xf32> to vector<2x64xf32>
    %5 = arith.addf %2, %4 : vector<2x64xf32>
    %c0_5 = arith.constant 0 : index
    %c0_6 = arith.constant 0 : index
    %6 = vector.load %arg3[%c0_5, %c0_6] : memref<2x64xf32, #tpu.memory_space<vmem>>, vector<2x64xf32>
    tpu.vector_store %arg3[%c0_5, %c0_6], %5 {strides = array<i32>} : memref<2x64xf32, #tpu.memory_space<vmem>>, vector<2x64xf32>,
    return
  }
}

module attributes {stable_mosaic.version = 11 : i64} {
  func.func @_lstm_cell_kernel(%arg0: memref<1x64xf32, #tpu.memory_space<vmem>>, %arg1: memref<1x16xf32, #tpu.memory_space<vmem>>, %arg2: memref<1x16xf32, #tpu.memory_space<vmem>>, %arg3: memref<16x64xf32, #tpu.memory_space<vmem>>, %arg4: memref<1x16xf32, #tpu.memory_space<vmem>>, %arg5: memref<1x16xf32, #tpu.memory_space<vmem>>) attributes {dimension_semantics = [], scalar_prefetch = 0 : i64, scratch_operands = 0 : i64, tpu.core_type = #tpu.core_type<tc>} {
    %c0 = arith.constant 0 : index
    %c0_0 = arith.constant 0 : index
    %0 = vector.load %arg0[%c0, %c0_0] : memref<1x64xf32, #tpu.memory_space<vmem>>, vector<1x64xf32>
    %c0_1 = arith.constant 0 : index
    %c0_2 = arith.constant 0 : index
    %1 = vector.load %arg1[%c0_1, %c0_2] : memref<1x16xf32, #tpu.memory_space<vmem>>, vector<1x16xf32>
    %c0_3 = arith.constant 0 : index
    %c0_4 = arith.constant 0 : index
    %2 = vector.load %arg3[%c0_3, %c0_4] : memref<16x64xf32, #tpu.memory_space<vmem>>, vector<16x64xf32>
    %cst = arith.constant dense<0.000000e+00> : vector<1x64xf32>
    %3 = tpu.matmul %1, %2, %cst {dimension_numbers = #tpu.dot_dimension_numbers<[1], [0], [0], [1], [0, 0, 1, 1], [], []>} : vector<1x16xf32>, vector<16x64xf32>, vector<1x64xf32> -> vector<1x64xf32>
    %4 = arith.addf %0, %3 : vector<1x64xf32>
    %5 = vector.extract_strided_slice %4 {offsets = [0, 0], sizes = [1, 16], strides = [1, 1]} : vector<1x64xf32> to vector<1x16xf32>
    %cst_5 = arith.constant 0.000000e+00 : f32
    %6 = vector.broadcast %cst_5 : f32 to vector<1x16xf32>
    %7 = arith.subf %6, %5 : vector<1x16xf32>
    %8 = math.exp %7 : vector<1x16xf32>
    %cst_6 = arith.constant 1.000000e+00 : f32
    %9 = vector.broadcast %cst_6 : f32 to vector<1x16xf32>
    %10 = arith.addf %9, %8 : vector<1x16xf32>
    %cst_7 = arith.constant 1.000000e+00 : f32
    %11 = vector.broadcast %cst_7 : f32 to vector<1x16xf32>
    %12 = arith.divf %11, %10 : vector<1x16xf32>
    %13 = vector.extract_strided_slice %4 {offsets = [0, 16], sizes = [1, 16], strides = [1, 1]} : vector<1x64xf32> to vector<1x16xf32>
    %cst_8 = arith.constant 0.000000e+00 : f32
    %14 = vector.broadcast %cst_8 : f32 to vector<1x16xf32>
    %15 = arith.subf %14, %13 : vector<1x16xf32>
    %16 = math.exp %15 : vector<1x16xf32>
    %cst_9 = arith.constant 1.000000e+00 : f32
    %17 = vector.broadcast %cst_9 : f32 to vector<1x16xf32>
    %18 = arith.addf %17, %16 : vector<1x16xf32>
    %cst_10 = arith.constant 1.000000e+00 : f32
    %19 = vector.broadcast %cst_10 : f32 to vector<1x16xf32>
    %20 = arith.divf %19, %18 : vector<1x16xf32>
    %21 = vector.extract_strided_slice %4 {offsets = [0, 32], sizes = [1, 16], strides = [1, 1]} : vector<1x64xf32> to vector<1x16xf32>
    %22 = math.tanh %21 : vector<1x16xf32>
    %23 = vector.extract_strided_slice %4 {offsets = [0, 48], sizes = [1, 16], strides = [1, 1]} : vector<1x64xf32> to vector<1x16xf32>
    %cst_11 = arith.constant 0.000000e+00 : f32
    %24 = vector.broadcast %cst_11 : f32 to vector<1x16xf32>
    %25 = arith.subf %24, %23 : vector<1x16xf32>
    %26 = math.exp %25 : vector<1x16xf32>
    %cst_12 = arith.constant 1.000000e+00 : f32
    %27 = vector.broadcast %cst_12 : f32 to vector<1x16xf32>
    %28 = arith.addf %27, %26 : vector<1x16xf32>
    %cst_13 = arith.constant 1.000000e+00 : f32
    %29 = vector.broadcast %cst_13 : f32 to vector<1x16xf32>
    %30 = arith.divf %29, %28 : vector<1x16xf32>
    %c0_14 = arith.constant 0 : index
    %c0_15 = arith.constant 0 : index
    %31 = vector.load %arg2[%c0_14, %c0_15] : memref<1x16xf32, #tpu.memory_space<vmem>>, vector<1x16xf32>
    %32 = arith.mulf %20, %31 : vector<1x16xf32>
    %33 = arith.mulf %12, %22 : vector<1x16xf32>
    %34 = arith.addf %32, %33 : vector<1x16xf32>
    %35 = math.tanh %34 : vector<1x16xf32>
    %36 = arith.mulf %30, %35 : vector<1x16xf32>
    %c0_16 = arith.constant 0 : index
    %c0_17 = arith.constant 0 : index
    %37 = vector.load %arg4[%c0_16, %c0_17] : memref<1x16xf32, #tpu.memory_space<vmem>>, vector<1x16xf32>
    tpu.vector_store %arg4[%c0_16, %c0_17], %36 {strides = array<i32>} : memref<1x16xf32, #tpu.memory_space<vmem>>, vector<1x16xf32>,
    %c0_18 = arith.constant 0 : index
    %c0_19 = arith.constant 0 : index
    %38 = vector.load %arg5[%c0_18, %c0_19] : memref<1x16xf32, #tpu.memory_space<vmem>>, vector<1x16xf32>
    tpu.vector_store %arg5[%c0_18, %c0_19], %34 {strides = array<i32>} : memref<1x16xf32, #tpu.memory_space<vmem>>, vector<1x16xf32>,
    return
  }
}

module attributes {stable_mosaic.version = 11 : i64} {
  func.func @_linear_kernel(%arg0: memref<2x32xf32, #tpu.memory_space<vmem>>, %arg1: memref<32x32xf32, #tpu.memory_space<vmem>>, %arg2: memref<1x32xf32, #tpu.memory_space<vmem>>, %arg3: memref<2x32xf32, #tpu.memory_space<vmem>>) attributes {dimension_semantics = [], scalar_prefetch = 0 : i64, scratch_operands = 0 : i64, tpu.core_type = #tpu.core_type<tc>} {
    %c0 = arith.constant 0 : index
    %c0_0 = arith.constant 0 : index
    %0 = vector.load %arg0[%c0, %c0_0] : memref<2x32xf32, #tpu.memory_space<vmem>>, vector<2x32xf32>
    %c0_1 = arith.constant 0 : index
    %c0_2 = arith.constant 0 : index
    %1 = vector.load %arg1[%c0_1, %c0_2] : memref<32x32xf32, #tpu.memory_space<vmem>>, vector<32x32xf32>
    %cst = arith.constant dense<0.000000e+00> : vector<2x32xf32>
    %2 = tpu.matmul %0, %1, %cst {dimension_numbers = #tpu.dot_dimension_numbers<[1], [0], [0], [1], [0, 0, 1, 1], [], []>} : vector<2x32xf32>, vector<32x32xf32>, vector<2x32xf32> -> vector<2x32xf32>
    %c0_3 = arith.constant 0 : index
    %c0_4 = arith.constant 0 : index
    %3 = vector.load %arg2[%c0_3, %c0_4] : memref<1x32xf32, #tpu.memory_space<vmem>>, vector<1x32xf32>
    %4 = vector.broadcast %3 : vector<1x32xf32> to vector<2x32xf32>
    %5 = arith.addf %2, %4 : vector<2x32xf32>
    %c0_5 = arith.constant 0 : index
    %c0_6 = arith.constant 0 : index
    %6 = vector.load %arg3[%c0_5, %c0_6] : memref<2x32xf32, #tpu.memory_space<vmem>>, vector<2x32xf32>
    tpu.vector_store %arg3[%c0_5, %c0_6], %5 {strides = array<i32>} : memref<2x32xf32, #tpu.memory_space<vmem>>, vector<2x32xf32>,
    return
  }
}

module attributes {stable_mosaic.version = 11 : i64} {
  func.func @_attention_kernel(%arg0: i32, %arg1: memref<1x2x8xf32, #tpu.memory_space<vmem>>, %arg2: memref<1x2x8xf32, #tpu.memory_space<vmem>>, %arg3: memref<1x2x8xf32, #tpu.memory_space<vmem>>, %arg4: memref<1x2x8xf32, #tpu.memory_space<vmem>>) attributes {dimension_semantics = [#tpu.dimension_semantics<parallel>], iteration_bounds = array<i64: 4>, scalar_prefetch = 0 : i64, scratch_operands = 0 : i64, tpu.core_type = #tpu.core_type<tc>, window_params = [{transform_indices = @transform_0, window_bounds = array<i64: 1, 2, 8>}, {transform_indices = @transform_1, window_bounds = array<i64: 1, 2, 8>}, {transform_indices = @transform_2, window_bounds = array<i64: 1, 2, 8>}, {transform_indices = @transform_3, window_bounds = array<i64: 1, 2, 8>}]} {
    %c0 = arith.constant 0 : index
    %c0_0 = arith.constant 0 : index
    %c0_1 = arith.constant 0 : index
    %0 = vector.load %arg1[%c0, %c0_0, %c0_1] : memref<1x2x8xf32, #tpu.memory_space<vmem>>, vector<1x2x8xf32>
    %1 = vector.shape_cast %0 : vector<1x2x8xf32> to vector<2x8xf32>
    %c0_2 = arith.constant 0 : index
    %c0_3 = arith.constant 0 : index
    %c0_4 = arith.constant 0 : index
    %2 = vector.load %arg2[%c0_2, %c0_3, %c0_4] : memref<1x2x8xf32, #tpu.memory_space<vmem>>, vector<1x2x8xf32>
    %3 = vector.shape_cast %2 : vector<1x2x8xf32> to vector<2x8xf32>
    %c0_5 = arith.constant 0 : index
    %c0_6 = arith.constant 0 : index
    %c0_7 = arith.constant 0 : index
    %4 = vector.load %arg3[%c0_5, %c0_6, %c0_7] : memref<1x2x8xf32, #tpu.memory_space<vmem>>, vector<1x2x8xf32>
    %5 = vector.shape_cast %4 : vector<1x2x8xf32> to vector<2x8xf32>
    %cst = arith.constant dense<0.000000e+00> : vector<2x2xf32>
    %6 = tpu.matmul %1, %3, %cst {dimension_numbers = #tpu.dot_dimension_numbers<[1], [1], [0], [0], [0, 0, 1, 0], [], []>} : vector<2x8xf32>, vector<2x8xf32>, vector<2x2xf32> -> vector<2x2xf32>
    %cst_8 = arith.constant 0.353553385 : f32
    %7 = vector.broadcast %cst_8 : f32 to vector<2x2xf32>
    %8 = arith.mulf %6, %7 : vector<2x2xf32>
    %cst_9 = arith.constant dense<0xFF800000> : vector<2xf32>
    %9 = vector.multi_reduction <maximumf>, %8, %cst_9 [1] : vector<2x2xf32> to vector<2xf32>
    %10 = vector.shape_cast %9 : vector<2xf32> to vector<2x1xf32>
    %11 = vector.broadcast %10 : vector<2x1xf32> to vector<2x2xf32>
    %12 = arith.subf %8, %11 : vector<2x2xf32>
    %13 = math.exp %12 : vector<2x2xf32>
    %cst_10 = arith.constant dense<0.000000e+00> : vector<2xf32>
    %14 = vector.multi_reduction <add>, %13, %cst_10 [1] : vector<2x2xf32> to vector<2xf32>
    %15 = vector.shape_cast %14 : vector<2xf32> to vector<2x1xf32>
    %16 = vector.broadcast %15 : vector<2x1xf32> to vector<2x2xf32>
    %17 = arith.divf %13, %16 : vector<2x2xf32>
    %cst_11 = arith.constant dense<0.000000e+00> : vector<2x8xf32>
    %18 = tpu.matmul %17, %5, %cst_11 {dimension_numbers = #tpu.dot_dimension_numbers<[1], [0], [0], [1], [0, 0, 1, 1], [], []>} : vector<2x2xf32>, vector<2x8xf32>, vector<2x8xf32> -> vector<2x8xf32>
    %c0_12 = arith.constant 0 : index
    %c0_13 = arith.constant 0 : index
    %c0_14 = arith.constant 0 : index
    %19 = vector.load %arg4[%c0_12, %c0_13, %c0_14] : memref<1x2x8xf32, #tpu.memory_space<vmem>>, vector<1x2x8xf32>
    %20 = vector.shape_cast %19 : vector<1x2x8xf32> to vector<2x8xf32>
    %21 = vector.shape_cast %18 : vector<2x8xf32> to vector<1x2x8xf32>
    tpu.vector_store %arg4[%c0_12, %c0_13, %c0_14], %21 {strides = array<i32>} : memref<1x2x8xf32, #tpu.memory_space<vmem>>, vector<1x2x8xf32>,
    return
  }
  func.func @transform_0(%arg0: i32) -> (i32, i32, i32) {
    %c0_i32 = arith.constant 0 : i32
    %c0_i32_0 = arith.constant 0 : i32
    %c0_i32_1 = arith.constant 0 : i32
    return %arg0, %c0_i32, %c0_i32_0 : i32, i32, i32
  }
  func.func @transform_1(%arg0: i32) -> (i32, i32, i32) {
    %c0_i32 = arith.constant 0 : i32
    %c0_i32_0 = arith.constant 0 : i32
    %c0_i32_1 = arith.constant 0 : i32
    return %arg0, %c0_i32, %c0_i32_0 : i32, i32, i32
  }
  func.func @transform_2(%arg0: i32) -> (i32, i32, i32) {
    %c0_i32 = arith.constant 0 : i32
    %c0_i32_0 = arith.constant 0 : i32
    %c0_i32_1 = arith.constant 0 : i32
    return %arg0, %c0_i32, %c0_i32_0 : i32, i32, i32
  }
  func.func @transform_3(%arg0: i32) -> (i32, i32, i32) {
    %c0_i32 = arith.constant 0 : i32
    %c0_i32_0 = arith.constant 0 : i32
    %c0_i32_1 = arith.constant 0 : i32
    return %arg0, %c0_i32, %c0_i32_0 : i32, i32, i32
  }
}

module attributes {stable_mosaic.version = 11 : i64} {
  func.func @_reweight_kernel(%arg0: memref<2x32xf32, #tpu.memory_space<vmem>>, %arg1: memref<2x32xf32, #tpu.memory_space<vmem>>, %arg2: memref<2x32xf32, #tpu.memory_space<vmem>>) attributes {dimension_semantics = [], scalar_prefetch = 0 : i64, scratch_operands = 0 : i64, tpu.core_type = #tpu.core_type<tc>} {
    %c0 = arith.constant 0 : index
    %c0_0 = arith.constant 0 : index
    %0 = vector.load %arg0[%c0, %c0_0] : memref<2x32xf32, #tpu.memory_space<vmem>>, vector<2x32xf32>
    %c0_1 = arith.constant 0 : index
    %c0_2 = arith.constant 0 : index
    %1 = vector.load %arg1[%c0_1, %c0_2] : memref<2x32xf32, #tpu.memory_space<vmem>>, vector<2x32xf32>
    %cst = arith.constant dense<0.000000e+00> : vector<2x2xf32>
    %2 = tpu.matmul %0, %1, %cst {dimension_numbers = #tpu.dot_dimension_numbers<[1], [1], [0], [0], [0, 0, 1, 0], [], []>} : vector<2x32xf32>, vector<2x32xf32>, vector<2x2xf32> -> vector<2x2xf32>
    %cst_3 = arith.constant dense<0xFF800000> : vector<2xf32>
    %3 = vector.multi_reduction <maximumf>, %2, %cst_3 [1] : vector<2x2xf32> to vector<2xf32>
    %4 = vector.shape_cast %3 : vector<2xf32> to vector<2x1xf32>
    %5 = vector.broadcast %4 : vector<2x1xf32> to vector<2x2xf32>
    %6 = arith.subf %2, %5 : vector<2x2xf32>
    %7 = math.exp %6 : vector<2x2xf32>
    %cst_4 = arith.constant dense<0.000000e+00> : vector<2xf32>
    %8 = vector.multi_reduction <add>, %7, %cst_4 [1] : vector<2x2xf32> to vector<2xf32>
    %9 = vector.shape_cast %8 : vector<2xf32> to vector<2x1xf32>
    %10 = vector.broadcast %9 : vector<2x1xf32> to vector<2x2xf32>
    %11 = arith.divf %7, %10 : vector<2x2xf32>
    %cst_5 = arith.constant dense<0.000000e+00> : vector<2x32xf32>
    %12 = tpu.matmul %11, %1, %cst_5 {dimension_numbers = #tpu.dot_dimension_numbers<[1], [0], [0], [1], [0, 0, 1, 1], [], []>} : vector<2x2xf32>, vector<2x32xf32>, vector<2x32xf32> -> vector<2x32xf32>
    %c0_6 = arith.constant 0 : index
    %c0_7 = arith.constant 0 : index
    %13 = vector.load %arg2[%c0_6, %c0_7] : memref<2x32xf32, #tpu.memory_space<vmem>>, vector<2x32xf32>
    tpu.vector_store %arg2[%c0_6, %c0_7], %12 {strides = array<i32>} : memref<2x32xf32, #tpu.memory_space<vmem>>, vector<2x32xf32>,
    return
  }
}

module attributes {stable_mosaic.version = 11 : i64} {
  func.func @_linear_kernel(%arg0: memref<2x96xf32, #tpu.memory_space<vmem>>, %arg1: memref<96x32xf32, #tpu.memory_space<vmem>>, %arg2: memref<1x32xf32, #tpu.memory_space<vmem>>, %arg3: memref<2x32xf32, #tpu.memory_space<vmem>>) attributes {dimension_semantics = [], scalar_prefetch = 0 : i64, scratch_operands = 0 : i64, tpu.core_type = #tpu.core_type<tc>} {
    %c0 = arith.constant 0 : index
    %c0_0 = arith.constant 0 : index
    %0 = vector.load %arg0[%c0, %c0_0] : memref<2x96xf32, #tpu.memory_space<vmem>>, vector<2x96xf32>
    %c0_1 = arith.constant 0 : index
    %c0_2 = arith.constant 0 : index
    %1 = vector.load %arg1[%c0_1, %c0_2] : memref<96x32xf32, #tpu.memory_space<vmem>>, vector<96x32xf32>
    %cst = arith.constant dense<0.000000e+00> : vector<2x32xf32>
    %2 = tpu.matmul %0, %1, %cst {dimension_numbers = #tpu.dot_dimension_numbers<[1], [0], [0], [1], [0, 0, 1, 1], [], []>} : vector<2x96xf32>, vector<96x32xf32>, vector<2x32xf32> -> vector<2x32xf32>
    %c0_3 = arith.constant 0 : index
    %c0_4 = arith.constant 0 : index
    %3 = vector.load %arg2[%c0_3, %c0_4] : memref<1x32xf32, #tpu.memory_space<vmem>>, vector<1x32xf32>
    %4 = vector.broadcast %3 : vector<1x32xf32> to vector<2x32xf32>
    %5 = arith.addf %2, %4 : vector<2x32xf32>
    %c0_5 = arith.constant 0 : index
    %c0_6 = arith.constant 0 : index
    %6 = vector.load %arg3[%c0_5, %c0_6] : memref<2x32xf32, #tpu.memory_space<vmem>>, vector<2x32xf32>
    tpu.vector_store %arg3[%c0_5, %c0_6], %5 {strides = array<i32>} : memref<2x32xf32, #tpu.memory_space<vmem>>, vector<2x32xf32>,
    return
  }
}

module attributes {stable_mosaic.version = 11 : i64} {
  func.func @_linear_kernel(%arg0: memref<2x32xf32, #tpu.memory_space<vmem>>, %arg1: memref<32x4xf32, #tpu.memory_space<vmem>>, %arg2: memref<1x4xf32, #tpu.memory_space<vmem>>, %arg3: memref<2x4xf32, #tpu.memory_space<vmem>>) attributes {dimension_semantics = [], scalar_prefetch = 0 : i64, scratch_operands = 0 : i64, tpu.core_type = #tpu.core_type<tc>} {
    %c0 = arith.constant 0 : index
    %c0_0 = arith.constant 0 : index
    %0 = vector.load %arg0[%c0, %c0_0] : memref<2x32xf32, #tpu.memory_space<vmem>>, vector<2x32xf32>
    %c0_1 = arith.constant 0 : index
    %c0_2 = arith.constant 0 : index
    %1 = vector.load %arg1[%c0_1, %c0_2] : memref<32x4xf32, #tpu.memory_space<vmem>>, vector<32x4xf32>
    %cst = arith.constant dense<0.000000e+00> : vector<2x4xf32>
    %2 = tpu.matmul %0, %1, %cst {dimension_numbers = #tpu.dot_dimension_numbers<[1], [0], [0], [1], [0, 0, 1, 1], [], []>} : vector<2x32xf32>, vector<32x4xf32>, vector<2x4xf32> -> vector<2x4xf32>
    %c0_3 = arith.constant 0 : index
    %c0_4 = arith.constant 0 : index
    %3 = vector.load %arg2[%c0_3, %c0_4] : memref<1x4xf32, #tpu.memory_space<vmem>>, vector<1x4xf32>
    %4 = vector.broadcast %3 : vector<1x4xf32> to vector<2x4xf32>
    %5 = arith.addf %2, %4 : vector<2x4xf32>
    %c0_5 = arith.constant 0 : index
    %c0_6 = arith.constant 0 : index
    %6 = vector.load %arg3[%c0_5, %c0_6] : memref<2x4xf32, #tpu.memory_space<vmem>>, vector<2x4xf32>
    tpu.vector_store %arg3[%c0_5, %c0_6], %5 {strides = array<i32>} : memref<2x4xf32, #tpu.memory_space<vmem>>, vector<2x4xf32>,
    return
  }
}

module attributes {stable_mosaic.version = 11 : i64} {
  func.func @_head_kernel(%arg0: memref<2x4xf32, #tpu.memory_space<vmem>>, %arg1: memref<2x4xf32, #tpu.memory_space<vmem>>, %arg2: memref<1x1xf32, #tpu.memory_space<vmem>>, %arg3: memref<2x4xf32, #tpu.memory_space<vmem>>) attributes {dimension_semantics = [], scalar_prefetch = 0 : i64, scratch_operands = 0 : i64, tpu.core_type = #tpu.core_type<tc>} {
    %c0 = arith.constant 0 : index
    %c0_0 = arith.constant 0 : index
    %0 = vector.load %arg0[%c0, %c0_0] : memref<2x4xf32, #tpu.memory_space<vmem>>, vector<2x4xf32>
    %c0_1 = arith.constant 0 : index
    %c0_2 = arith.constant 0 : index
    %1 = vector.load %arg1[%c0_1, %c0_2] : memref<2x4xf32, #tpu.memory_space<vmem>>, vector<2x4xf32>
    %c0_3 = arith.constant 0 : index
    %c0_4 = arith.constant 0 : index
    %2 = vector.load %arg2[%c0_3, %c0_4] : memref<1x1xf32, #tpu.memory_space<vmem>>, vector<1x1xf32>
    %3 = vector.broadcast %2 : vector<1x1xf32> to vector<2x4xf32>
    %4 = arith.mulf %1, %3 : vector<2x4xf32>
    %5 = arith.addf %0, %4 : vector<2x4xf32>
    %cst = arith.constant dense<0xFF800000> : vector<2xf32>
    %6 = vector.multi_reduction <maximumf>, %5, %cst [1] : vector<2x4xf32> to vector<2xf32>
    %7 = vector.shape_cast %6 : vector<2xf32> to vector<2x1xf32>
    %8 = vector.broadcast %7 : vector<2x1xf32> to vector<2x4xf32>
    %9 = arith.subf %5, %8 : vector<2x4xf32>
    %10 = math.exp %9 : vector<2x4xf32>
    %cst_5 = arith.constant dense<0.000000e+00> : vector<2xf32>
    %11 = vector.multi_reduction <add>, %10, %cst_5 [1] : vector<2x4xf32> to vector<2xf32>
    %12 = vector.shape_cast %11 : vector<2xf32> to vector<2x1xf32>
    %13 = vector.broadcast %12 : vector<2x1xf32> to vector<2x4xf32>
    %14 = arith.divf %10, %13 : vector<2x4xf32>
    %c0_6 = arith.constant 0 : index
    %c0_7 = arith.constant 0 : index
    %15 = vector.load %arg3[%c0_6, %c0_7] : memref<2x4xf32, #tpu.memory_space<vmem>>, vector<2x4xf32>
    tpu.vector_store %arg3[%c0_6, %c0_7], %14 {strides = array<i32>} : memref<2x4xf32, #tpu.memory_space<vmem>>, vector<2x4xf32>,
    return
  }
}

</mosaic_0001>

<llo_original>
// kernel: reverse.4
$region0: #{reverse.4}
  %s0 = inlined_call_operand.vmem [shape: f32[2,64], index: 0, kind: input, shape index: {}]
  %s1 = inlined_call_operand.vmem [shape: f32[2,64], index: 1, kind: output, shape index: {}]
  $region1: #{reverse.4} parent=0
    #allocation0 [shape = 'u8[8192]{0}', space=vmem, size = 0x2000, scoped, tag = 'operand span for operand 0']
    #allocation1 [shape = 'u8[2048]{0}', space=vmem, size = 0x800, scoped, tag = 'packed  for operand 0']
    #allocation2 [shape = 'u8[4096]{0}', space=vmem, size = 0x1000, scoped, tag = 'operand span for operand 1']
    #allocation3 [shape = 'u8[1024]{0}', space=vmem, size = 0x400, scoped, tag = 'packed  for operand 1']
    %s2 = scalar_lea.vmem [#allocation1], 2
    // Predicated region
    $region2: #{reverse.4} parent=1 // pred_check
      _
    $region3: #{reverse.4} parent=1 // pred_check_branch
      %4 = sbr.rel (0) target = $region5
    $region4: #{reverse.4} parent=1 // pred_region
      // Predicated region
      $region6: #{reverse.4} parent=4 // pred_check
        _
      $region7: #{reverse.4} parent=4 // pred_check_branch
        %6 = sbr.rel target = $region9
      $region8: #{reverse.4} parent=4 // pred_region
        // Predicated region
        $region21: #{reverse.4} parent=8 // pred_check
          _
        $region22: #{reverse.4} parent=8 // pred_check_branch
          %21 = sbr.rel (0) target = $region24
        $region23: #{reverse.4} parent=8 // pred_region
          loop: start=0, step=1, limit=1
          $region25: #{reverse.4} parent=23 // loop_pre_header
            _
          $region26: #{reverse.4} parent=23 // loop_header
            %s24 = sphi 0, %s28
            %p25 = scmp.ge.s32.totalorder %s24, 1
            %s29 = sphi %s0, %s0
            %s30 = sphi %s2, %s2
          $region27: #{reverse.4} parent=23 // loop_header_branch
            %27 = sbr.rel (%p25) target = $region31
          $region28: #{reverse.4} parent=23 // loop_body
            %v31 = vld [vmem:[%s29] sm:$0x3]
            %32 = vst [vmem:[%s30] sm:$0x3] %v31
          $region29: #{reverse.4} parent=23 // loop_footer
            %s28 = sadd.s32 1, %s24
          $region30: #{reverse.4} parent=23 // loop_footer_branch
            %23 = sbr.rel target = $region26
          $region31: #{reverse.4} parent=23 // loop_exit
            _
        $region24: #{reverse.4} parent=8 // pred_fallthru
          _
      $region9: #{reverse.4} parent=4 // pred_fallthru
        _
      // Predicated region
      $region10: #{reverse.4} parent=4 // pred_check
        _
      $region11: #{reverse.4} parent=4 // pred_check_branch
        %8 = sbr.rel (0) target = $region13
      $region12: #{reverse.4} parent=4 // pred_region
        loop: start=0, step=1, limit=1
        $region14: #{reverse.4} parent=12 // loop_pre_header
          _
        $region15: #{reverse.4} parent=12 // loop_header
          %s11 = sphi 0, %s15
          %p12 = scmp.ge.s32.totalorder %s11, 1
          %s16 = sphi %s0, %s0
          %s17 = sphi %s2, %s2
        $region16: #{reverse.4} parent=12 // loop_header_branch
          %14 = sbr.rel (%p12) target = $region20
        $region17: #{reverse.4} parent=12 // loop_body
          %v18 = vld [vmem:[%s16] sm:$0x3]
          %19 = vst [vmem:[%s17] sm:$0x3] %v18
        $region18: #{reverse.4} parent=12 // loop_footer
          %s15 = sadd.s32 1, %s11
        $region19: #{reverse.4} parent=12 // loop_footer_branch
          %10 = sbr.rel target = $region15
        $region20: #{reverse.4} parent=12 // loop_exit
          _
      $region13: #{reverse.4} parent=4 // pred_fallthru
        _
    $region5: #{reverse.4} parent=1 // pred_fallthru
      _
    %33 = vnop
    %s35 = sshllo.u32 0, 2
    %s36 = scalar_lea.vmem [#allocation1], 2
    %v37 = vld [vmem:[%s36] sm:%s35]
    %s38 = scalar_lea.vmem [#allocation0], 8
    %39 = vst [vmem:[%s38] sm:%s35] %v37
    %v40 = vld [vmem:[#allocation1] sm:%s35]
    %41 = vst [vmem:[#allocation0] sm:%s35] %v40
    %s42 = scalar_lea.vmem [#allocation0], 7
    %v43 = vld [vmem:[%s42] ss:$-1 sm:$0xff]
    %v44 = vrot.slane %v43, 6
    %45 = vst [vmem:[#allocation2] sm:$0xff] %v44
    %s46 = scalar_lea.vmem [#allocation0], 8
    %s47 = scalar_lea.vmem %s46, 7 [#allocation0]
    %v48 = vld [vmem:[%s47] ss:$-1 sm:$0xff]
    %v49 = vrot.slane %v48, 6
    %v50 = vlaneseq
    %v51 = vshrl.u32 %v50, 7
    %vm52 = vcmp.lt.s32.totalorder %v51, 2
    %53 = vst.msk [vmem:[#allocation2] sm:$0xff] %vm52, %v49
    %s55 = sshllo.u32 0, 2
    %v57 = vld [vmem:[#allocation2] sm:%s55]
    %s58 = sshllo.u32 0, 2
    %59 = vst [vmem:[#allocation3] sm:%s58] %v57
    // Predicated region
    $region32: #{reverse.4} parent=1 // pred_check
      _
    $region33: #{reverse.4} parent=1 // pred_check_branch
      %61 = sbr.rel (0) target = $region35
    $region34: #{reverse.4} parent=1 // pred_region
      // Predicated region
      $region36: #{reverse.4} parent=34 // pred_check
        _
      $region37: #{reverse.4} parent=34 // pred_check_branch
        %63 = sbr.rel target = $region39
      $region38: #{reverse.4} parent=34 // pred_region
        // Predicated region
        $region51: #{reverse.4} parent=38 // pred_check
          _
        $region52: #{reverse.4} parent=38 // pred_check_branch
          %78 = sbr.rel (0) target = $region54
        $region53: #{reverse.4} parent=38 // pred_region
          loop: start=0, step=1, limit=1
          $region55: #{reverse.4} parent=53 // loop_pre_header
            _
          $region56: #{reverse.4} parent=53 // loop_header
            %s81 = sphi 0, %s85
            %p82 = scmp.ge.s32.totalorder %s81, 1
            %s86 = sphi [#allocation3], [#allocation3]
            %s87 = sphi %s1, %s1
          $region57: #{reverse.4} parent=53 // loop_header_branch
            %84 = sbr.rel (%p82) target = $region61
          $region58: #{reverse.4} parent=53 // loop_body
            %v88 = vld [vmem:[%s86] sm:$0x3]
            %89 = vst [vmem:[%s87] sm:$0x3] %v88
          $region59: #{reverse.4} parent=53 // loop_footer
            %s85 = sadd.s32 1, %s81
          $region60: #{reverse.4} parent=53 // loop_footer_branch
            %80 = sbr.rel target = $region56
          $region61: #{reverse.4} parent=53 // loop_exit
            _
        $region54: #{reverse.4} parent=38 // pred_fallthru
          _
      $region39: #{reverse.4} parent=34 // pred_fallthru
        _
      // Predicated region
      $region40: #{reverse.4} parent=34 // pred_check
        _
      $region41: #{reverse.4} parent=34 // pred_check_branch
        %65 = sbr.rel (0) target = $region43
      $region42: #{reverse.4} parent=34 // pred_region
        loop: start=0, step=1, limit=1
        $region44: #{reverse.4} parent=42 // loop_pre_header
          _
        $region45: #{reverse.4} parent=42 // loop_header
          %s68 = sphi 0, %s72
          %p69 = scmp.ge.s32.totalorder %s68, 1
          %s73 = sphi [#allocation3], [#allocation3]
          %s74 = sphi %s1, %s1
        $region46: #{reverse.4} parent=42 // loop_header_branch
          %71 = sbr.rel (%p69) target = $region50
        $region47: #{reverse.4} parent=42 // loop_body
          %v75 = vld [vmem:[%s73] sm:$0x3]
          %76 = vst [vmem:[%s74] sm:$0x3] %v75
        $region48: #{reverse.4} parent=42 // loop_footer
          %s72 = sadd.s32 1, %s68
        $region49: #{reverse.4} parent=42 // loop_footer_branch
          %67 = sbr.rel target = $region45
        $region50: #{reverse.4} parent=42 // loop_exit
          _
      $region43: #{reverse.4} parent=34 // pred_fallthru
        _
    $region35: #{reverse.4} parent=1 // pred_fallthru
      _
    %90 = vnop

// kernel: closed_call.122
$region0: #{closed_call.122}
  #allocation0 [shape = 'u32[]', space=smem, size = 0x4, offset = 0x4, fixed_abs, tag = 'smem constant byte address 0x4 - core index']
  #allocation1 [shape = 'u32[144,128]{1,0:T(1,128)}', space=vmem, size = 0x12000, scoped, tag = 'internal scratch']
  %s0 = inlined_call_operand.vmem [shape: f32[2,64], index: 0, kind: input, shape index: {}]
  %s1 = inlined_call_operand.vmem [shape: f32[2,16], index: 1, kind: input, shape index: {}]
  %s2 = inlined_call_operand.vmem [shape: f32[2,16], index: 2, kind: input, shape index: {}]
  %s3 = inlined_call_operand.vmem [shape: f32[16,64], index: 3, kind: input, shape index: {}]
  %s4 = inlined_call_operand.vmem [shape: f32[2,16], index: 4, kind: output, shape index: {0}]
  %s5 = inlined_call_operand.vmem [shape: f32[2,16], index: 5, kind: output, shape index: {1}]
  %6 = xla_tuple %s4, %s5
  %s7 = sld [smem:[#allocation0]]
  $region34: #{closed_call.122} parent=0
    _
  %s9 = ssub.s32 1, %s7
  %s10 = scalar_select 0, %s9, %s7
  // Predicated region
  $region2: #{closed_call.122} parent=0 // pred_check
    _
  $region3: #{closed_call.122} parent=0 // pred_check_branch
    %12 = sbr.rel (0) target = $region5
  $region4: #{closed_call.122} parent=0 // pred_region
    _
  $region5: #{closed_call.122} parent=0 // pred_fallthru
    _
  // Predicated region
  $region6: #{closed_call.122} parent=0 // pred_check
    _
  $region7: #{closed_call.122} parent=0 // pred_check_branch
    %14 = sbr.rel (0) target = $region9
  $region8: #{closed_call.122} parent=0 // pred_region
    _
  $region9: #{closed_call.122} parent=0 // pred_fallthru
    _
  // Predicated region
  $region10: #{closed_call.122} parent=0 // pred_check
    _
  $region11: #{closed_call.122} parent=0 // pred_check_branch
    %16 = sbr.rel (0) target = $region13
  $region12: #{closed_call.122} parent=0 // pred_region
    _
  $region13: #{closed_call.122} parent=0 // pred_fallthru
    _
  // Predicated region
  $region14: #{closed_call.122} parent=0 // pred_check
    _
  $region15: #{closed_call.122} parent=0 // pred_check_branch
    %18 = sbr.rel (0) target = $region17
  $region16: #{closed_call.122} parent=0 // pred_region
    _
  $region17: #{closed_call.122} parent=0 // pred_fallthru
    _
  %v19 = vld [vmem:[%s0] sm:$0x3]
  %v20 = vld [vmem:[%s1] sm:$0x3]
  %v21 = vld [vmem:[%s3] sm:$0xff]
  %v22 = vld [vmem:[%s3 + $0x8] sm:$0xff]
  %vm23 = vcmask 130048
  %v25 = vsel %vm23, %v20, 0
  %27 = vmatprep.subr.mxu0 0.0
  %28 = vmatpush1.msra.mxu0 %v21
  %29 = vmatprep.subr.mxu0 0.0
  %30 = vmatpush1.msra.mxu0 %v22
  %31 = vmatprep.subr.mxu0 0.0
  %32 = vmatpush1.msra.mxu0 0.0
  %33 = vmatprep.subr.mxu0 0.0
  %34 = vmatpush1.msra.mxu0 0.0
  %35 = vmatprep.subr.mxu0 0.0
  %36 = vmatpush1.msra.mxu0 0.0
  %37 = vmatprep.subr.mxu0 0.0
  %38 = vmatpush1.msra.mxu0 0.0
  %39 = vmatprep.subr.mxu0 0.0
  %40 = vmatpush1.msra.mxu0 0.0
  %41 = vmatprep.subr.mxu0 0.0
  %42 = vmatpush1.msra.mxu0 0.0
  %43 = vmatprep.subr.mxu0 0.0
  %44 = vmatpush1.msra.mxu0 0.0
  %45 = vmatprep.subr.mxu0 0.0
  %46 = vmatpush1.msra.mxu0 0.0
  %47 = vmatprep.subr.mxu0 0.0
  %48 = vmatpush1.msra.mxu0 0.0
  %49 = vmatprep.subr.mxu0 0.0
  %50 = vmatpush1.msra.mxu0 0.0
  %51 = vmatprep.subr.mxu0 0.0
  %52 = vmatpush1.msra.mxu0 0.0
  %53 = vmatprep.subr.mxu0 0.0
  %54 = vmatpush1.msra.mxu0 0.0
  %55 = vmatprep.subr.mxu0 0.0
  %56 = vmatpush1.msra.mxu0 0.0
  %57 = vmatprep.subr.mxu0 0.0
  %58 = vmatpush1.msra.mxu0 0.0
  %59 = vmatprep.subr.mxu0 0.0
  %60 = vmatpush1.msra.mxu0 0.0
  %61 = vmatprep.subr.mxu0 0.0
  %62 = vmatpush1.msra.mxu0 0.0
  %63 = vmatprep.subr.mxu0 0.0
  %64 = vmatpush1.msra.mxu0 0.0
  %65 = vmatprep.subr.mxu0 0.0
  %66 = vmatpush1.msra.mxu0 0.0
  %67 = vmatprep.subr.mxu0 0.0
  %68 = vmatpush1.msra.mxu0 0.0
  %69 = vmatprep.subr.mxu0 0.0
  %70 = vmatpush1.msra.mxu0 0.0
  %71 = vmatprep.subr.mxu0 0.0
  %72 = vmatpush1.msra.mxu0 0.0
  %73 = vmatprep.subr.mxu0 0.0
  %74 = vmatpush1.msra.mxu0 0.0
  %75 = vmatprep.subr.mxu0 0.0
  %76 = vmatpush1.msra.mxu0 0.0
  %77 = vmatprep.subr.mxu0 0.0
  %78 = vmatpush1.msra.mxu0 0.0
  %79 = vmatprep.subr.mxu0 0.0
  %80 = vmatpush1.msra.mxu0 0.0
  %81 = vmatprep.subr.mxu0 0.0
  %82 = vmatpush1.msra.mxu0 0.0
  %83 = vmatprep.subr.mxu0 0.0
  %84 = vmatpush1.msra.mxu0 0.0
  %85 = vmatprep.subr.mxu0 0.0
  %86 = vmatpush1.msra.mxu0 0.0
  %87 = vmatprep.subr.mxu0 0.0
  %88 = vmatpush1.msra.mxu0 0.0
  %89 = vmatprep.subr.mxu0 0.0
  %90 = vmatpush1.msra.mxu0 0.0
  %91 = vmatprep.mubr.f32.mxu0 0.0
  %92 = vmatmul.mubr.f32.gmra.mrb[0].mxu0 %v25
  %v93 = vpop.f32.mrb[0].mxu0
  %v94 = vadd.f32 0.0, %v93
  %v95 = vpop.f32.mrb[0].mxu0
  %96 = vdwg.mxu0
  %v97 = vadd.f32 %v19, %v94
  %v98 = vsub.f32 0.0, %v97
  %v99 = vmul.f32 %v98, 1.442695
  %v100 = vpow.pop %v99
  %v101 = vadd.f32 %v100, 1.0
  %v102 = vrcp.pop %v101
  %v103 = vmul.f32 1.0, %v102
  %v104 = vtanh.pop %v97
  %v105 = vld [vmem:[%s2] sm:$0x3]
  %107 = vrot.lane.b32.xlu0 %v105, 16
  %v108 = vpop.permute.xlu0 %107
  %v110 = vmul.f32 %v103, %v108
  %112 = vrot.lane.b32.xlu0 %v104, 96
  %v113 = vpop.permute.xlu0 %112
  %v115 = vmul.f32 %v103, %v113
  %117 = vrot.lane.b32.xlu0 %v115, 16
  %v118 = vpop.permute.xlu0 %117
  %v120 = vadd.f32 %v110, %v118
  %v121 = vtanh.pop %v120
  %123 = vrot.lane.b32.xlu0 %v121, 32
  %v124 = vpop.permute.xlu0 %123
  %v126 = vmul.f32 %v103, %v124
  %128 = vrot.lane.b32.xlu0 %v126, 80
  %v129 = vpop.permute.xlu0 %128
  %vm131 = vcmask 123904
  %132 = vst.msk [vmem:[%s4] sm:$0x3] %vm131, %v129
  %134 = vrot.lane.b32.xlu0 %v120, 112
  %v135 = vpop.permute.xlu0 %134
  %137 = vst.msk [vmem:[%s5] sm:$0x3] %vm131, %v135
  // Predicated region
  $region18: #{closed_call.122} parent=0 // pred_check
    _
  $region19: #{closed_call.122} parent=0 // pred_check_branch
    %139 = sbr.rel (0) target = $region21
  $region20: #{closed_call.122} parent=0 // pred_region
    _
  $region21: #{closed_call.122} parent=0 // pred_fallthru
    _
  // Predicated region
  $region22: #{closed_call.122} parent=0 // pred_check
    _
  $region23: #{closed_call.122} parent=0 // pred_check_branch
    %141 = sbr.rel (0) target = $region25
  $region24: #{closed_call.122} parent=0 // pred_region
    _
  $region25: #{closed_call.122} parent=0 // pred_fallthru
    _
  // Predicated region
  $region26: #{closed_call.122} parent=0 // pred_check
    _
  $region27: #{closed_call.122} parent=0 // pred_check_branch
    %143 = sbr.rel (0) target = $region29
  $region28: #{closed_call.122} parent=0 // pred_region
    _
  $region29: #{closed_call.122} parent=0 // pred_fallthru
    _
  // Predicated region
  $region30: #{closed_call.122} parent=0 // pred_check
    _
  $region31: #{closed_call.122} parent=0 // pred_check_branch
    %145 = sbr.rel (0) target = $region33
  $region32: #{closed_call.122} parent=0 // pred_region
    _
  $region33: #{closed_call.122} parent=0 // pred_fallthru
    _

// kernel: hlsn_forward.8
$region0: #{hlsn_forward.8}
  #allocation0 [shape = 'u32[]', space=smem, size = 0x4, offset = 0x4, fixed_abs, tag = 'smem constant byte address 0x4 - core index']
  #allocation1 [shape = 'u32[144,128]{1,0:T(1,128)}', space=vmem, size = 0x12000, scoped, tag = 'internal scratch']
  %s0 = inlined_call_operand.vmem [shape: f32[16,32], index: 0, kind: input, shape index: {}]
  %s1 = inlined_call_operand.vmem [shape: f32[32,64], index: 1, kind: input, shape index: {}]
  %s2 = inlined_call_operand.vmem [shape: f32[1,64], index: 2, kind: input, shape index: {}]
  %s3 = inlined_call_operand.vmem [shape: f32[16,64], index: 3, kind: output, shape index: {}]
  %s4 = sld [smem:[#allocation0]]
  $region22: #{hlsn_forward.8} parent=0
    _
  %s6 = ssub.s32 1, %s4
  %s7 = scalar_select 0, %s6, %s4
  // Predicated region
  $region2: #{hlsn_forward.8} parent=0 // pred_check
    _
  $region3: #{hlsn_forward.8} parent=0 // pred_check_branch
    %9 = sbr.rel (0) target = $region5
  $region4: #{hlsn_forward.8} parent=0 // pred_region
    _
  $region5: #{hlsn_forward.8} parent=0 // pred_fallthru
    _
  // Predicated region
  $region6: #{hlsn_forward.8} parent=0 // pred_check
    _
  $region7: #{hlsn_forward.8} parent=0 // pred_check_branch
    %11 = sbr.rel (0) target = $region9
  $region8: #{hlsn_forward.8} parent=0 // pred_region
    _
  $region9: #{hlsn_forward.8} parent=0 // pred_fallthru
    _
  // Predicated region
  $region10: #{hlsn_forward.8} parent=0 // pred_check
    _
  $region11: #{hlsn_forward.8} parent=0 // pred_check_branch
    %13 = sbr.rel (0) target = $region13
  $region12: #{hlsn_forward.8} parent=0 // pred_region
    _
  $region13: #{hlsn_forward.8} parent=0 // pred_fallthru
    _
  %v14 = vld [vmem:[%s0] sm:$0xff]
  %v15 = vld [vmem:[%s0 + $0x8] sm:$0xff]
  %v16 = vld [vmem:[%s1] sm:$0xff]
  %v17 = vld [vmem:[%s1 + $0x8] sm:$0xff]
  %v18 = vld [vmem:[%s1 + $0x10] sm:$0xff]
  %v19 = vld [vmem:[%s1 + $0x18] sm:$0xff]
  %v20 = vld [vmem:[%s2] sm:$0x1]
  %v22 = vlaneseq
  %v23 = vshrl.u32 %v22, 7
  %v24 = vsub.s32 0, %v23
  %v25 = vrot.slane %v20, %v24
  %vm27 = vcmask 261120
  %v29 = vsel %vm27, %v14, 0
  %v32 = vsel %vm27, %v15, 0
  %34 = vmatprep.subr.mxu0 0.0
  %35 = vmatpush1.msra.mxu0 %v16
  %36 = vmatprep.subr.mxu0 0.0
  %37 = vmatpush1.msra.mxu0 %v17
  %38 = vmatprep.subr.mxu0 0.0
  %39 = vmatpush1.msra.mxu0 %v18
  %40 = vmatprep.subr.mxu0 0.0
  %41 = vmatpush1.msra.mxu0 %v19
  %42 = vmatprep.subr.mxu0 0.0
  %43 = vmatpush1.msra.mxu0 0.0
  %44 = vmatprep.subr.mxu0 0.0
  %45 = vmatpush1.msra.mxu0 0.0
  %46 = vmatprep.subr.mxu0 0.0
  %47 = vmatpush1.msra.mxu0 0.0
  %48 = vmatprep.subr.mxu0 0.0
  %49 = vmatpush1.msra.mxu0 0.0
  %50 = vmatprep.subr.mxu0 0.0
  %51 = vmatpush1.msra.mxu0 0.0
  %52 = vmatprep.subr.mxu0 0.0
  %53 = vmatpush1.msra.mxu0 0.0
  %54 = vmatprep.subr.mxu0 0.0
  %55 = vmatpush1.msra.mxu0 0.0
  %56 = vmatprep.subr.mxu0 0.0
  %57 = vmatpush1.msra.mxu0 0.0
  %58 = vmatprep.subr.mxu0 0.0
  %59 = vmatpush1.msra.mxu0 0.0
  %60 = vmatprep.subr.mxu0 0.0
  %61 = vmatpush1.msra.mxu0 0.0
  %62 = vmatprep.subr.mxu0 0.0
  %63 = vmatpush1.msra.mxu0 0.0
  %64 = vmatprep.subr.mxu0 0.0
  %65 = vmatpush1.msra.mxu0 0.0
  %66 = vmatprep.subr.mxu0 0.0
  %67 = vmatpush1.msra.mxu0 0.0
  %68 = vmatprep.subr.mxu0 0.0
  %69 = vmatpush1.msra.mxu0 0.0
  %70 = vmatprep.subr.mxu0 0.0
  %71 = vmatpush1.msra.mxu0 0.0
  %72 = vmatprep.subr.mxu0 0.0
  %73 = vmatpush1.msra.mxu0 0.0
  %74 = vmatprep.subr.mxu0 0.0
  %75 = vmatpush1.msra.mxu0 0.0
  %76 = vmatprep.subr.mxu0 0.0
  %77 = vmatpush1.msra.mxu0 0.0
  %78 = vmatprep.subr.mxu0 0.0
  %79 = vmatpush1.msra.mxu0 0.0
  %80 = vmatprep.subr.mxu0 0.0
  %81 = vmatpush1.msra.mxu0 0.0
  %82 = vmatprep.subr.mxu0 0.0
  %83 = vmatpush1.msra.mxu0 0.0
  %84 = vmatprep.subr.mxu0 0.0
  %85 = vmatpush1.msra.mxu0 0.0
  %86 = vmatprep.subr.mxu0 0.0
  %87 = vmatpush1.msra.mxu0 0.0
  %88 = vmatprep.subr.mxu0 0.0
  %89 = vmatpush1.msra.mxu0 0.0
  %90 = vmatprep.subr.mxu0 0.0
  %91 = vmatpush1.msra.mxu0 0.0
  %92 = vmatprep.subr.mxu0 0.0
  %93 = vmatpush1.msra.mxu0 0.0
  %94 = vmatprep.subr.mxu0 0.0
  %95 = vmatpush1.msra.mxu0 0.0
  %96 = vmatprep.subr.mxu0 0.0
  %97 = vmatpush1.msra.mxu0 0.0
  %98 = vmatprep.mubr.f32.mxu0 0.0
  %99 = vmatmul.mubr.f32.gmra.mrb[0].mxu0 %v29
  %v100 = vpop.f32.mrb[0].mxu0
  %v101 = vadd.f32 %v25, %v100
  %v102 = vpop.f32.mrb[0].mxu0
  %103 = vmatprep.mubr.f32.mxu0 0.0
  %104 = vmatmul.mubr.f32.gmra.mrb[0].mxu0 %v32
  %v105 = vpop.f32.mrb[0].mxu0
  %v106 = vadd.f32 %v25, %v105
  %v107 = vpop.f32.mrb[0].mxu0
  %108 = vdwg.mxu0
  %vm109 = vcmask 523264
  %110 = vst.msk [vmem:[%s3] sm:$0xff] %vm109, %v101
  %111 = vst.msk [vmem:[%s3 + $0x8] sm:$0xff] %vm109, %v106
  // Predicated region
  $region14: #{hlsn_forward.8} parent=0 // pred_check
    _
  $region15: #{hlsn_forward.8} parent=0 // pred_check_branch
    %113 = sbr.rel (0) target = $region17
  $region16: #{hlsn_forward.8} parent=0 // pred_region
    _
  $region17: #{hlsn_forward.8} parent=0 // pred_fallthru
    _
  // Predicated region
  $region18: #{hlsn_forward.8} parent=0 // pred_check
    _
  $region19: #{hlsn_forward.8} parent=0 // pred_check_branch
    %115 = sbr.rel (0) target = $region21
  $region20: #{hlsn_forward.8} parent=0 // pred_region
    _
  $region21: #{hlsn_forward.8} parent=0 // pred_fallthru
    _

// kernel: closed_call.125
$region0: #{closed_call.125}
  #allocation0 [shape = 'u32[]', space=smem, size = 0x4, offset = 0x4, fixed_abs, tag = 'smem constant byte address 0x4 - core index']
  #allocation1 [shape = 'u32[144,128]{1,0:T(1,128)}', space=vmem, size = 0x12000, scoped, tag = 'internal scratch']
  %s0 = inlined_call_operand.vmem [shape: f32[2,32], index: 0, kind: input, shape index: {}]
  %s1 = inlined_call_operand.vmem [shape: f32[32,64], index: 1, kind: input, shape index: {}]
  %s2 = inlined_call_operand.vmem [shape: f32[1,64], index: 2, kind: input, shape index: {}]
  %s3 = inlined_call_operand.vmem [shape: f32[2,64], index: 3, kind: output, shape index: {}]
  %s4 = sld [smem:[#allocation0]]
  $region22: #{closed_call.125} parent=0
    _
  %s6 = ssub.s32 1, %s4
  %s7 = scalar_select 0, %s6, %s4
  // Predicated region
  $region2: #{closed_call.125} parent=0 // pred_check
    _
  $region3: #{closed_call.125} parent=0 // pred_check_branch
    %9 = sbr.rel (0) target = $region5
  $region4: #{closed_call.125} parent=0 // pred_region
    _
  $region5: #{closed_call.125} parent=0 // pred_fallthru
    _
  // Predicated region
  $region6: #{closed_call.125} parent=0 // pred_check
    _
  $region7: #{closed_call.125} parent=0 // pred_check_branch
    %11 = sbr.rel (0) target = $region9
  $region8: #{closed_call.125} parent=0 // pred_region
    _
  $region9: #{closed_call.125} parent=0 // pred_fallthru
    _
  // Predicated region
  $region10: #{closed_call.125} parent=0 // pred_check
    _
  $region11: #{closed_call.125} parent=0 // pred_check_branch
    %13 = sbr.rel (0) target = $region13
  $region12: #{closed_call.125} parent=0 // pred_region
    _
  $region13: #{closed_call.125} parent=0 // pred_fallthru
    _
  %v14 = vld [vmem:[%s0] sm:$0x3]
  %v15 = vld [vmem:[%s1] sm:$0xff]
  %v16 = vld [vmem:[%s1 + $0x8] sm:$0xff]
  %v17 = vld [vmem:[%s1 + $0x10] sm:$0xff]
  %v18 = vld [vmem:[%s1 + $0x18] sm:$0xff]
  %v19 = vld [vmem:[%s2] sm:$0x1]
  %v21 = vlaneseq
  %v22 = vshrl.u32 %v21, 7
  %v23 = vsub.s32 0, %v22
  %v24 = vrot.slane %v19, %v23
  %vm26 = vcmask 261120
  %v28 = vsel %vm26, %v14, 0
  %30 = vmatprep.subr.mxu0 0.0
  %31 = vmatpush1.msra.mxu0 %v15
  %32 = vmatprep.subr.mxu0 0.0
  %33 = vmatpush1.msra.mxu0 %v16
  %34 = vmatprep.subr.mxu0 0.0
  %35 = vmatpush1.msra.mxu0 %v17
  %36 = vmatprep.subr.mxu0 0.0
  %37 = vmatpush1.msra.mxu0 %v18
  %38 = vmatprep.subr.mxu0 0.0
  %39 = vmatpush1.msra.mxu0 0.0
  %40 = vmatprep.subr.mxu0 0.0
  %41 = vmatpush1.msra.mxu0 0.0
  %42 = vmatprep.subr.mxu0 0.0
  %43 = vmatpush1.msra.mxu0 0.0
  %44 = vmatprep.subr.mxu0 0.0
  %45 = vmatpush1.msra.mxu0 0.0
  %46 = vmatprep.subr.mxu0 0.0
  %47 = vmatpush1.msra.mxu0 0.0
  %48 = vmatprep.subr.mxu0 0.0
  %49 = vmatpush1.msra.mxu0 0.0
  %50 = vmatprep.subr.mxu0 0.0
  %51 = vmatpush1.msra.mxu0 0.0
  %52 = vmatprep.subr.mxu0 0.0
  %53 = vmatpush1.msra.mxu0 0.0
  %54 = vmatprep.subr.mxu0 0.0
  %55 = vmatpush1.msra.mxu0 0.0
  %56 = vmatprep.subr.mxu0 0.0
  %57 = vmatpush1.msra.mxu0 0.0
  %58 = vmatprep.subr.mxu0 0.0
  %59 = vmatpush1.msra.mxu0 0.0
  %60 = vmatprep.subr.mxu0 0.0
  %61 = vmatpush1.msra.mxu0 0.0
  %62 = vmatprep.subr.mxu0 0.0
  %63 = vmatpush1.msra.mxu0 0.0
  %64 = vmatprep.subr.mxu0 0.0
  %65 = vmatpush1.msra.mxu0 0.0
  %66 = vmatprep.subr.mxu0 0.0
  %67 = vmatpush1.msra.mxu0 0.0
  %68 = vmatprep.subr.mxu0 0.0
  %69 = vmatpush1.msra.mxu0 0.0
  %70 = vmatprep.subr.mxu0 0.0
  %71 = vmatpush1.msra.mxu0 0.0
  %72 = vmatprep.subr.mxu0 0.0
  %73 = vmatpush1.msra.mxu0 0.0
  %74 = vmatprep.subr.mxu0 0.0
  %75 = vmatpush1.msra.mxu0 0.0
  %76 = vmatprep.subr.mxu0 0.0
  %77 = vmatpush1.msra.mxu0 0.0
  %78 = vmatprep.subr.mxu0 0.0
  %79 = vmatpush1.msra.mxu0 0.0
  %80 = vmatprep.subr.mxu0 0.0
  %81 = vmatpush1.msra.mxu0 0.0
  %82 = vmatprep.subr.mxu0 0.0
  %83 = vmatpush1.msra.mxu0 0.0
  %84 = vmatprep.subr.mxu0 0.0
  %85 = vmatpush1.msra.mxu0 0.0
  %86 = vmatprep.subr.mxu0 0.0
  %87 = vmatpush1.msra.mxu0 0.0
  %88 = vmatprep.subr.mxu0 0.0
  %89 = vmatpush1.msra.mxu0 0.0
  %90 = vmatprep.subr.mxu0 0.0
  %91 = vmatpush1.msra.mxu0 0.0
  %92 = vmatprep.subr.mxu0 0.0
  %93 = vmatpush1.msra.mxu0 0.0
  %94 = vmatprep.mubr.f32.mxu0 0.0
  %95 = vmatmul.mubr.f32.gmra.mrb[0].mxu0 %v28
  %v96 = vpop.f32.mrb[0].mxu0
  %v97 = vadd.f32 %v24, %v96
  %v98 = vpop.f32.mrb[0].mxu0
  %99 = vdwg.mxu0
  %vm100 = vcmask 517120
  %101 = vst.msk [vmem:[%s3] sm:$0x3] %vm100, %v97
  // Predicated region
  $region14: #{closed_call.125} parent=0 // pred_check
    _
  $region15: #{closed_call.125} parent=0 // pred_check_branch
    %103 = sbr.rel (0) target = $region17
  $region16: #{closed_call.125} parent=0 // pred_region
    _
  $region17: #{closed_call.125} parent=0 // pred_fallthru
    _
  // Predicated region
  $region18: #{closed_call.125} parent=0 // pred_check
    _
  $region19: #{closed_call.125} parent=0 // pred_check_branch
    %105 = sbr.rel (0) target = $region21
  $region20: #{closed_call.125} parent=0 // pred_region
    _
  $region21: #{closed_call.125} parent=0 // pred_fallthru
    _

// kernel: closed_call.141
$region0: #{closed_call.141}
  #allocation0 [shape = 'u32[]', space=smem, size = 0x4, offset = 0x4, fixed_abs, tag = 'smem constant byte address 0x4 - core index']
  #allocation1 [shape = 'u32[144,128]{1,0:T(1,128)}', space=vmem, size = 0x12000, scoped, tag = 'internal scratch']
  %s0 = inlined_call_operand.vmem [shape: f32[1,64], index: 0, kind: input, shape index: {}]
  %s1 = inlined_call_operand.vmem [shape: f32[1,16], index: 1, kind: input, shape index: {}]
  %s2 = inlined_call_operand.vmem [shape: f32[1,16], index: 2, kind: input, shape index: {}]
  %s3 = inlined_call_operand.vmem [shape: f32[16,64], index: 3, kind: input, shape index: {}]
  %s4 = inlined_call_operand.vmem [shape: f32[1,16], index: 4, kind: output, shape index: {0}]
  %s5 = inlined_call_operand.vmem [shape: f32[1,16], index: 5, kind: output, shape index: {1}]
  %6 = xla_tuple %s4, %s5
  %s7 = sld [smem:[#allocation0]]
  $region34: #{closed_call.141} parent=0
    _
  %s9 = ssub.s32 1, %s7
  %s10 = scalar_select 0, %s9, %s7
  // Predicated region
  $region2: #{closed_call.141} parent=0 // pred_check
    _
  $region3: #{closed_call.141} parent=0 // pred_check_branch
    %12 = sbr.rel (0) target = $region5
  $region4: #{closed_call.141} parent=0 // pred_region
    _
  $region5: #{closed_call.141} parent=0 // pred_fallthru
    _
  // Predicated region
  $region6: #{closed_call.141} parent=0 // pred_check
    _
  $region7: #{closed_call.141} parent=0 // pred_check_branch
    %14 = sbr.rel (0) target = $region9
  $region8: #{closed_call.141} parent=0 // pred_region
    _
  $region9: #{closed_call.141} parent=0 // pred_fallthru
    _
  // Predicated region
  $region10: #{closed_call.141} parent=0 // pred_check
    _
  $region11: #{closed_call.141} parent=0 // pred_check_branch
    %16 = sbr.rel (0) target = $region13
  $region12: #{closed_call.141} parent=0 // pred_region
    _
  $region13: #{closed_call.141} parent=0 // pred_fallthru
    _
  // Predicated region
  $region14: #{closed_call.141} parent=0 // pred_check
    _
  $region15: #{closed_call.141} parent=0 // pred_check_branch
    %18 = sbr.rel (0) target = $region17
  $region16: #{closed_call.141} parent=0 // pred_region
    _
  $region17: #{closed_call.141} parent=0 // pred_fallthru
    _
  %v19 = vld [vmem:[%s0] sm:$0x1]
  %v20 = vld [vmem:[%s1] sm:$0x1]
  %v21 = vld [vmem:[%s3] sm:$0xff]
  %v22 = vld [vmem:[%s3 + $0x8] sm:$0xff]
  %vm23 = vcmask 130048
  %v25 = vsel %vm23, %v20, 0
  %27 = vmatprep.subr.mxu0 0.0
  %28 = vmatpush1.msra.mxu0 %v21
  %29 = vmatprep.subr.mxu0 0.0
  %30 = vmatpush1.msra.mxu0 %v22
  %31 = vmatprep.subr.mxu0 0.0
  %32 = vmatpush1.msra.mxu0 0.0
  %33 = vmatprep.subr.mxu0 0.0
  %34 = vmatpush1.msra.mxu0 0.0
  %35 = vmatprep.subr.mxu0 0.0
  %36 = vmatpush1.msra.mxu0 0.0
  %37 = vmatprep.subr.mxu0 0.0
  %38 = vmatpush1.msra.mxu0 0.0
  %39 = vmatprep.subr.mxu0 0.0
  %40 = vmatpush1.msra.mxu0 0.0
  %41 = vmatprep.subr.mxu0 0.0
  %42 = vmatpush1.msra.mxu0 0.0
  %43 = vmatprep.subr.mxu0 0.0
  %44 = vmatpush1.msra.mxu0 0.0
  %45 = vmatprep.subr.mxu0 0.0
  %46 = vmatpush1.msra.mxu0 0.0
  %47 = vmatprep.subr.mxu0 0.0
  %48 = vmatpush1.msra.mxu0 0.0
  %49 = vmatprep.subr.mxu0 0.0
  %50 = vmatpush1.msra.mxu0 0.0
  %51 = vmatprep.subr.mxu0 0.0
  %52 = vmatpush1.msra.mxu0 0.0
  %53 = vmatprep.subr.mxu0 0.0
  %54 = vmatpush1.msra.mxu0 0.0
  %55 = vmatprep.subr.mxu0 0.0
  %56 = vmatpush1.msra.mxu0 0.0
  %57 = vmatprep.subr.mxu0 0.0
  %58 = vmatpush1.msra.mxu0 0.0
  %59 = vmatprep.subr.mxu0 0.0
  %60 = vmatpush1.msra.mxu0 0.0
  %61 = vmatprep.subr.mxu0 0.0
  %62 = vmatpush1.msra.mxu0 0.0
  %63 = vmatprep.subr.mxu0 0.0
  %64 = vmatpush1.msra.mxu0 0.0
  %65 = vmatprep.subr.mxu0 0.0
  %66 = vmatpush1.msra.mxu0 0.0
  %67 = vmatprep.subr.mxu0 0.0
  %68 = vmatpush1.msra.mxu0 0.0
  %69 = vmatprep.subr.mxu0 0.0
  %70 = vmatpush1.msra.mxu0 0.0
  %71 = vmatprep.subr.mxu0 0.0
  %72 = vmatpush1.msra.mxu0 0.0
  %73 = vmatprep.subr.mxu0 0.0
  %74 = vmatpush1.msra.mxu0 0.0
  %75 = vmatprep.subr.mxu0 0.0
  %76 = vmatpush1.msra.mxu0 0.0
  %77 = vmatprep.subr.mxu0 0.0
  %78 = vmatpush1.msra.mxu0 0.0
  %79 = vmatprep.subr.mxu0 0.0
  %80 = vmatpush1.msra.mxu0 0.0
  %81 = vmatprep.subr.mxu0 0.0
  %82 = vmatpush1.msra.mxu0 0.0
  %83 = vmatprep.subr.mxu0 0.0
  %84 = vmatpush1.msra.mxu0 0.0
  %85 = vmatprep.subr.mxu0 0.0
  %86 = vmatpush1.msra.mxu0 0.0
  %87 = vmatprep.subr.mxu0 0.0
  %88 = vmatpush1.msra.mxu0 0.0
  %89 = vmatprep.subr.mxu0 0.0
  %90 = vmatpush1.msra.mxu0 0.0
  %91 = vmatprep.mubr.f32.mxu0 0.0
  %92 = vmatmul.mubr.f32.gmra.mrb[0].mxu0 %v25
  %v93 = vpop.f32.mrb[0].mxu0
  %v94 = vadd.f32 0.0, %v93
  %v95 = vpop.f32.mrb[0].mxu0
  %96 = vdwg.mxu0
  %v97 = vadd.f32 %v19, %v94
  %v98 = vsub.f32 0.0, %v97
  %v99 = vmul.f32 %v98, 1.442695
  %v100 = vpow.pop %v99
  %v101 = vadd.f32 %v100, 1.0
  %v102 = vrcp.pop %v101
  %v103 = vmul.f32 1.0, %v102
  %v104 = vtanh.pop %v97
  %v105 = vld [vmem:[%s2] sm:$0x1]
  %107 = vrot.lane.b32.xlu0 %v105, 16
  %v108 = vpop.permute.xlu0 %107
  %v110 = vmul.f32 %v103, %v108
  %112 = vrot.lane.b32.xlu0 %v104, 96
  %v113 = vpop.permute.xlu0 %112
  %v115 = vmul.f32 %v103, %v113
  %117 = vrot.lane.b32.xlu0 %v115, 16
  %v118 = vpop.permute.xlu0 %117
  %v120 = vadd.f32 %v110, %v118
  %v121 = vtanh.pop %v120
  %123 = vrot.lane.b32.xlu0 %v121, 32
  %v124 = vpop.permute.xlu0 %123
  %v126 = vmul.f32 %v103, %v124
  %v128 = vlaneseq
  %v129 = vshrl.u32 %v128, 7
  %v130 = vsub.s32 0, %v129
  %v131 = vrot.slane %v126, %v130
  %132 = vrot.lane.b32.xlu0 %v131, 80
  %v133 = vpop.permute.xlu0 %132
  %vm135 = vcmask 122880
  %136 = vst.msk [vmem:[%s4] sm:$0x1] %vm135, %v133
  %v138 = vlaneseq
  %v139 = vshrl.u32 %v138, 7
  %v140 = vsub.s32 0, %v139
  %v141 = vrot.slane %v120, %v140
  %142 = vrot.lane.b32.xlu0 %v141, 112
  %v143 = vpop.permute.xlu0 %142
  %145 = vst.msk [vmem:[%s5] sm:$0x1] %vm135, %v143
  // Predicated region
  $region18: #{closed_call.141} parent=0 // pred_check
    _
  $region19: #{closed_call.141} parent=0 // pred_check_branch
    %147 = sbr.rel (0) target = $region21
  $region20: #{closed_call.141} parent=0 // pred_region
    _
  $region21: #{closed_call.141} parent=0 // pred_fallthru
    _
  // Predicated region
  $region22: #{closed_call.141} parent=0 // pred_check
    _
  $region23: #{closed_call.141} parent=0 // pred_check_branch
    %149 = sbr.rel (0) target = $region25
  $region24: #{closed_call.141} parent=0 // pred_region
    _
  $region25: #{closed_call.141} parent=0 // pred_fallthru
    _
  // Predicated region
  $region26: #{closed_call.141} parent=0 // pred_check
    _
  $region27: #{closed_call.141} parent=0 // pred_check_branch
    %151 = sbr.rel (0) target = $region29
  $region28: #{closed_call.141} parent=0 // pred_region
    _
  $region29: #{closed_call.141} parent=0 // pred_fallthru
    _
  // Predicated region
  $region30: #{closed_call.141} parent=0 // pred_check
    _
  $region31: #{closed_call.141} parent=0 // pred_check_branch
    %153 = sbr.rel (0) target = $region33
  $region32: #{closed_call.141} parent=0 // pred_region
    _
  $region33: #{closed_call.141} parent=0 // pred_fallthru
    _

// kernel: closed_call.129
$region0: #{closed_call.129}
  #allocation0 [shape = 'u32[]', space=smem, size = 0x4, offset = 0x4, fixed_abs, tag = 'smem constant byte address 0x4 - core index']
  #allocation1 [shape = 'u32[144,128]{1,0:T(1,128)}', space=vmem, size = 0x12000, scoped, tag = 'internal scratch']
  %s0 = inlined_call_operand.vmem [shape: f32[2,32], index: 0, kind: input, shape index: {}]
  %s1 = inlined_call_operand.vmem [shape: f32[32,32], index: 1, kind: input, shape index: {}]
  %s2 = inlined_call_operand.vmem [shape: f32[1,32], index: 2, kind: input, shape index: {}]
  %s3 = inlined_call_operand.vmem [shape: f32[2,32], index: 3, kind: output, shape index: {}]
  %s4 = sld [smem:[#allocation0]]
  $region22: #{closed_call.129} parent=0
    _
  %s6 = ssub.s32 1, %s4
  %s7 = scalar_select 0, %s6, %s4
  // Predicated region
  $region2: #{closed_call.129} parent=0 // pred_check
    _
  $region3: #{closed_call.129} parent=0 // pred_check_branch
    %9 = sbr.rel (0) target = $region5
  $region4: #{closed_call.129} parent=0 // pred_region
    _
  $region5: #{closed_call.129} parent=0 // pred_fallthru
    _
  // Predicated region
  $region6: #{closed_call.129} parent=0 // pred_check
    _
  $region7: #{closed_call.129} parent=0 // pred_check_branch
    %11 = sbr.rel (0) target = $region9
  $region8: #{closed_call.129} parent=0 // pred_region
    _
  $region9: #{closed_call.129} parent=0 // pred_fallthru
    _
  // Predicated region
  $region10: #{closed_call.129} parent=0 // pred_check
    _
  $region11: #{closed_call.129} parent=0 // pred_check_branch
    %13 = sbr.rel (0) target = $region13
  $region12: #{closed_call.129} parent=0 // pred_region
    _
  $region13: #{closed_call.129} parent=0 // pred_fallthru
    _
  %v14 = vld [vmem:[%s0] sm:$0x3]
  %v15 = vld [vmem:[%s1] sm:$0xff]
  %v16 = vld [vmem:[%s1 + $0x8] sm:$0xff]
  %v17 = vld [vmem:[%s1 + $0x10] sm:$0xff]
  %v18 = vld [vmem:[%s1 + $0x18] sm:$0xff]
  %v19 = vld [vmem:[%s2] sm:$0x1]
  %v21 = vlaneseq
  %v22 = vshrl.u32 %v21, 7
  %v23 = vsub.s32 0, %v22
  %v24 = vrot.slane %v19, %v23
  %vm26 = vcmask 261120
  %v28 = vsel %vm26, %v14, 0
  %30 = vmatprep.subr.mxu0 0.0
  %31 = vmatpush1.msra.mxu0 %v15
  %32 = vmatprep.subr.mxu0 0.0
  %33 = vmatpush1.msra.mxu0 %v16
  %34 = vmatprep.subr.mxu0 0.0
  %35 = vmatpush1.msra.mxu0 %v17
  %36 = vmatprep.subr.mxu0 0.0
  %37 = vmatpush1.msra.mxu0 %v18
  %38 = vmatprep.subr.mxu0 0.0
  %39 = vmatpush1.msra.mxu0 0.0
  %40 = vmatprep.subr.mxu0 0.0
  %41 = vmatpush1.msra.mxu0 0.0
  %42 = vmatprep.subr.mxu0 0.0
  %43 = vmatpush1.msra.mxu0 0.0
  %44 = vmatprep.subr.mxu0 0.0
  %45 = vmatpush1.msra.mxu0 0.0
  %46 = vmatprep.subr.mxu0 0.0
  %47 = vmatpush1.msra.mxu0 0.0
  %48 = vmatprep.subr.mxu0 0.0
  %49 = vmatpush1.msra.mxu0 0.0
  %50 = vmatprep.subr.mxu0 0.0
  %51 = vmatpush1.msra.mxu0 0.0
  %52 = vmatprep.subr.mxu0 0.0
  %53 = vmatpush1.msra.mxu0 0.0
  %54 = vmatprep.subr.mxu0 0.0
  %55 = vmatpush1.msra.mxu0 0.0
  %56 = vmatprep.subr.mxu0 0.0
  %57 = vmatpush1.msra.mxu0 0.0
  %58 = vmatprep.subr.mxu0 0.0
  %59 = vmatpush1.msra.mxu0 0.0
  %60 = vmatprep.subr.mxu0 0.0
  %61 = vmatpush1.msra.mxu0 0.0
  %62 = vmatprep.subr.mxu0 0.0
  %63 = vmatpush1.msra.mxu0 0.0
  %64 = vmatprep.subr.mxu0 0.0
  %65 = vmatpush1.msra.mxu0 0.0
  %66 = vmatprep.subr.mxu0 0.0
  %67 = vmatpush1.msra.mxu0 0.0
  %68 = vmatprep.subr.mxu0 0.0
  %69 = vmatpush1.msra.mxu0 0.0
  %70 = vmatprep.subr.mxu0 0.0
  %71 = vmatpush1.msra.mxu0 0.0
  %72 = vmatprep.subr.mxu0 0.0
  %73 = vmatpush1.msra.mxu0 0.0
  %74 = vmatprep.subr.mxu0 0.0
  %75 = vmatpush1.msra.mxu0 0.0
  %76 = vmatprep.subr.mxu0 0.0
  %77 = vmatpush1.msra.mxu0 0.0
  %78 = vmatprep.subr.mxu0 0.0
  %79 = vmatpush1.msra.mxu0 0.0
  %80 = vmatprep.subr.mxu0 0.0
  %81 = vmatpush1.msra.mxu0 0.0
  %82 = vmatprep.subr.mxu0 0.0
  %83 = vmatpush1.msra.mxu0 0.0
  %84 = vmatprep.subr.mxu0 0.0
  %85 = vmatpush1.msra.mxu0 0.0
  %86 = vmatprep.subr.mxu0 0.0
  %87 = vmatpush1.msra.mxu0 0.0
  %88 = vmatprep.subr.mxu0 0.0
  %89 = vmatpush1.msra.mxu0 0.0
  %90 = vmatprep.subr.mxu0 0.0
  %91 = vmatpush1.msra.mxu0 0.0
  %92 = vmatprep.subr.mxu0 0.0
  %93 = vmatpush1.msra.mxu0 0.0
  %94 = vmatprep.mubr.f32.mxu0 0.0
  %95 = vmatmul.mubr.f32.gmra.mrb[0].mxu0 %v28
  %v96 = vpop.f32.mrb[0].mxu0
  %v97 = vadd.f32 %v24, %v96
  %v98 = vpop.f32.mrb[0].mxu0
  %99 = vdwg.mxu0
  %vm100 = vcmask 254976
  %101 = vst.msk [vmem:[%s3] sm:$0x3] %vm100, %v97
  // Predicated region
  $region14: #{closed_call.129} parent=0 // pred_check
    _
  $region15: #{closed_call.129} parent=0 // pred_check_branch
    %103 = sbr.rel (0) target = $region17
  $region16: #{closed_call.129} parent=0 // pred_region
    _
  $region17: #{closed_call.129} parent=0 // pred_fallthru
    _
  // Predicated region
  $region18: #{closed_call.129} parent=0 // pred_check
    _
  $region19: #{closed_call.129} parent=0 // pred_check_branch
    %105 = sbr.rel (0) target = $region21
  $region20: #{closed_call.129} parent=0 // pred_region
    _
  $region21: #{closed_call.129} parent=0 // pred_fallthru
    _

// kernel: closed_call.132
$region0: #{closed_call.132}
  #allocation0 [shape = 'u32[]', space=smem, size = 0x4, offset = 0x4, fixed_abs, tag = 'smem constant byte address 0x4 - core index']
  #allocation1 [shape = 'u32[144,128]{1,0:T(1,128)}', space=vmem, size = 0x12000, scoped, tag = 'internal scratch']
  %s0 = inlined_call_operand.vmem [shape: f32[4,2,8], index: 0, kind: input, shape index: {}]
  %s1 = inlined_call_operand.vmem [shape: f32[4,2,8], index: 1, kind: input, shape index: {}]
  %s2 = inlined_call_operand.vmem [shape: f32[4,2,8], index: 2, kind: input, shape index: {}]
  %s3 = inlined_call_operand.vmem [shape: f32[4,2,8], index: 3, kind: output, shape index: {}]
  %s4 = sld [smem:[#allocation0]]
  $region45: #{closed_call.132} parent=0
    _
  %s6 = ssub.s32 1, %s4
  %s7 = scalar_select 0, %s6, %s4
  loop: start=0, step=1, limit=6
  $region2: #{closed_call.132} parent=0 // loop_pre_header
    _
  $region3: #{closed_call.132} parent=0 // loop_header
    %s9 = sphi 0, %s13
    %p10 = scmp.ge.s32.totalorder %s9, 6
    %s19 = sphi 0, %s21
    %s22 = sphi 0, %s19
    %s23 = sphi 0, %s22
    %s39 = sphi 0, %s23
    %s45 = sphi 0, %s47
    %s48 = sphi 0, %s45
    %s49 = sphi 0, %s48
    %s65 = sphi 0, %s49
    %s71 = sphi 0, %s73
    %s74 = sphi 0, %s71
    %s75 = sphi 0, %s74
    %s91 = sphi 0, %s75
    %s97 = sphi 0, %s99
    %s100 = sphi 0, %s97
    %s101 = sphi 0, %s100
    %s117 = sphi 0, %s101
  $region4: #{closed_call.132} parent=0 // loop_header_branch
    %12 = sbr.rel (%p10) target = $region8
  $region5: #{closed_call.132} parent=0 // loop_body
    %s14 = ssub.s32 %s9, 1
    %s15 = ssub.s32 %s9, 2
    %s16 = sadd.s32 %s9, 1
    %s17 = ssub.s32 %s9, %s16
    %p18 = scmp.eq.s32.totalorder %s17, 0
    %s20 = sadd.s32 %s19, 1
    %s21 = scalar_select %p18, %s19, %s20
    %p24 = pneg %p18
    %p25 = scmp.eq.s32.totalorder %s9, 3
    %p26 = por %p24, %p25
    %p27 = scmp.ne.s32.totalorder %s19, %s22
    %p28 = scmp.eq.s32.totalorder %s9, 0
    %p29 = por %p27, %p28
    %p30 = scmp.ne.s32.totalorder %s19, %s22
    %p31 = scmp.eq.s32.totalorder %s14, 3
    %p32 = por %p30, %p31
    %p33 = scmp.ne.s32.totalorder %s22, %s23
    %p34 = scmp.eq.s32.totalorder %s14, 0
    %p35 = por %p33, %p34
    %p36 = scmp.ne.s32.totalorder %s22, %s23
    %p37 = scmp.eq.s32.totalorder %s15, 3
    %p38 = por %p36, %p37
    %p40 = scmp.ne.s32.totalorder %s23, %s39
    %p41 = scmp.eq.s32.totalorder %s15, 0
    %p42 = por %p40, %p41
    %s43 = ssub.s32 %s9, %s16
    %p44 = scmp.eq.s32.totalorder %s43, 0
    %s46 = sadd.s32 %s45, 1
    %s47 = scalar_select %p44, %s45, %s46
    %p50 = pneg %p44
    %p51 = scmp.eq.s32.totalorder %s9, 3
    %p52 = por %p50, %p51
    %p53 = scmp.ne.s32.totalorder %s45, %s48
    %p54 = scmp.eq.s32.totalorder %s9, 0
    %p55 = por %p53, %p54
    %p56 = scmp.ne.s32.totalorder %s45, %s48
    %p57 = scmp.eq.s32.totalorder %s14, 3
    %p58 = por %p56, %p57
    %p59 = scmp.ne.s32.totalorder %s48, %s49
    %p60 = scmp.eq.s32.totalorder %s14, 0
    %p61 = por %p59, %p60
    %p62 = scmp.ne.s32.totalorder %s48, %s49
    %p63 = scmp.eq.s32.totalorder %s15, 3
    %p64 = por %p62, %p63
    %p66 = scmp.ne.s32.totalorder %s49, %s65
    %p67 = scmp.eq.s32.totalorder %s15, 0
    %p68 = por %p66, %p67
    %s69 = ssub.s32 %s9, %s16
    %p70 = scmp.eq.s32.totalorder %s69, 0
    %s72 = sadd.s32 %s71, 1
    %s73 = scalar_select %p70, %s71, %s72
    %p76 = pneg %p70
    %p77 = scmp.eq.s32.totalorder %s9, 3
    %p78 = por %p76, %p77
    %p79 = scmp.ne.s32.totalorder %s71, %s74
    %p80 = scmp.eq.s32.totalorder %s9, 0
    %p81 = por %p79, %p80
    %p82 = scmp.ne.s32.totalorder %s71, %s74
    %p83 = scmp.eq.s32.totalorder %s14, 3
    %p84 = por %p82, %p83
    %p85 = scmp.ne.s32.totalorder %s74, %s75
    %p86 = scmp.eq.s32.totalorder %s14, 0
    %p87 = por %p85, %p86
    %p88 = scmp.ne.s32.totalorder %s74, %s75
    %p89 = scmp.eq.s32.totalorder %s15, 3
    %p90 = por %p88, %p89
    %p92 = scmp.ne.s32.totalorder %s75, %s91
    %p93 = scmp.eq.s32.totalorder %s15, 0
    %p94 = por %p92, %p93
    %s95 = ssub.s32 %s9, %s16
    %p96 = scmp.eq.s32.totalorder %s95, 0
    %s98 = sadd.s32 %s97, 1
    %s99 = scalar_select %p96, %s97, %s98
    %p102 = pneg %p96
    %p103 = scmp.eq.s32.totalorder %s9, 3
    %p104 = por %p102, %p103
    %p105 = scmp.ne.s32.totalorder %s97, %s100
    %p106 = scmp.eq.s32.totalorder %s9, 0
    %p107 = por %p105, %p106
    %p108 = scmp.ne.s32.totalorder %s97, %s100
    %p109 = scmp.eq.s32.totalorder %s14, 3
    %p110 = por %p108, %p109
    %p111 = scmp.ne.s32.totalorder %s100, %s101
    %p112 = scmp.eq.s32.totalorder %s14, 0
    %p113 = por %p111, %p112
    %p114 = scmp.ne.s32.totalorder %s100, %s101
    %p115 = scmp.eq.s32.totalorder %s15, 3
    %p116 = por %p114, %p115
    %p118 = scmp.ne.s32.totalorder %s101, %s117
    %p119 = scmp.eq.s32.totalorder %s15, 0
    %p120 = por %p118, %p119
    %p121 = scmp.le.s32.totalorder 1, %s9
    %p122 = scmp.lt.s32.totalorder %s9, 5
    %p123 = pnand %p121, %p122
    %p124 = pneg %p123
    // Predicated region
    $region9: #{closed_call.132} parent=5 // pred_check
      _
    $region10: #{closed_call.132} parent=5 // pred_check_branch
      %126 = sbr.rel (%p123) target = $region12
    $region11: #{closed_call.132} parent=5 // pred_region
      %s127 = ssub.s32 %s9, 1
    $region12: #{closed_call.132} parent=5 // pred_fallthru
      _
    %p128 = scmp.lt.s32.totalorder %s9, 4
    // Predicated region
    $region13: #{closed_call.132} parent=5 // pred_check
      %p129 = pneg %p128
    $region14: #{closed_call.132} parent=5 // pred_check_branch
      %131 = sbr.rel (%p129) target = $region16
    $region15: #{closed_call.132} parent=5 // pred_region
      // Predicated region
      $region17: #{closed_call.132} parent=15 // pred_check
        %p132 = pneg %p29
      $region18: #{closed_call.132} parent=15 // pred_check_branch
        %134 = sbr.rel (%p132) target = $region20
      $region19: #{closed_call.132} parent=15 // pred_region
        %p135 = scmp.lt.s32.totalorder %s9, 3
        %s136 = scalar_select %p135, %s9, 3
        %s137 = smul.addr %s136, 2
        %s138 = scalar_lea.vmem %s0, %s137
      $region20: #{closed_call.132} parent=15 // pred_fallthru
        _
      // Predicated region
      $region21: #{closed_call.132} parent=15 // pred_check
        %p139 = pneg %p55
      $region22: #{closed_call.132} parent=15 // pred_check_branch
        %141 = sbr.rel (%p139) target = $region24
      $region23: #{closed_call.132} parent=15 // pred_region
        %p142 = scmp.lt.s32.totalorder %s9, 3
        %s143 = scalar_select %p142, %s9, 3
        %s144 = smul.addr %s143, 2
        %s145 = scalar_lea.vmem %s1, %s144
      $region24: #{closed_call.132} parent=15 // pred_fallthru
        _
      // Predicated region
      $region25: #{closed_call.132} parent=15 // pred_check
        %p146 = pneg %p81
      $region26: #{closed_call.132} parent=15 // pred_check_branch
        %148 = sbr.rel (%p146) target = $region28
      $region27: #{closed_call.132} parent=15 // pred_region
        %p149 = scmp.lt.s32.totalorder %s9, 3
        %s150 = scalar_select %p149, %s9, 3
        %s151 = smul.addr %s150, 2
        %s152 = scalar_lea.vmem %s2, %s151
      $region28: #{closed_call.132} parent=15 // pred_fallthru
        _
    $region16: #{closed_call.132} parent=5 // pred_fallthru
      _
    %p153 = scmp.le.s32.totalorder 1, %s9
    %p154 = scmp.lt.s32.totalorder %s9, 5
    %p155 = pnand %p153, %p154
    %p156 = pneg %p155
    // Predicated region
    $region29: #{closed_call.132} parent=5 // pred_check
      _
    $region30: #{closed_call.132} parent=5 // pred_check_branch
      %158 = sbr.rel (%p155) target = $region32
    $region31: #{closed_call.132} parent=5 // pred_region
      %s159 = ssub.s32 %s9, 1
      %p160 = scmp.lt.s32.totalorder %s14, 3
      %s161 = scalar_select %p160, %s14, 3
      %s162 = smul.addr %s161, 2
      %s163 = scalar_lea.vmem %s0, %s162
      %p164 = pneg %p35
      %p165 = pneg %p32
      %p166 = scmp.lt.s32.totalorder %s14, 3
      %s167 = scalar_select %p166, %s14, 3
      %s168 = smul.addr %s167, 2
      %s169 = scalar_lea.vmem %s1, %s168
      %p170 = pneg %p61
      %p171 = pneg %p58
      %p172 = scmp.lt.s32.totalorder %s14, 3
      %s173 = scalar_select %p172, %s14, 3
      %s174 = smul.addr %s173, 2
      %s175 = scalar_lea.vmem %s2, %s174
      %p176 = pneg %p87
      %p177 = pneg %p84
      %p178 = pneg %p113
      %p179 = pneg %p110
      %p180 = scmp.lt.s32.totalorder %s14, 3
      %s181 = scalar_select %p180, %s14, 3
      %s182 = smul.addr %s181, 2
      %s183 = scalar_lea.vmem %s3, %s182
      %p184 = scmp.lt.s32.totalorder %s14, 3
      %s185 = scalar_select %p184, %s14, 3
      %s186 = smul.addr %s185, 2
      %s187 = scalar_lea.vmem %s0, %s186
      %p188 = scmp.lt.s32.totalorder %s14, 3
      %s189 = scalar_select %p188, %s14, 3
      %s190 = smul.addr %s189, 2
      %s191 = scalar_lea.vmem %s1, %s190
      %p192 = scmp.lt.s32.totalorder %s14, 3
      %s193 = scalar_select %p192, %s14, 3
      %s194 = smul.addr %s193, 2
      %s195 = scalar_lea.vmem %s2, %s194
      %p196 = scmp.lt.s32.totalorder %s14, 3
      %s197 = scalar_select %p196, %s14, 3
      %s198 = smul.addr %s197, 2
      %s199 = scalar_lea.vmem %s3, %s198
      %v200 = vld [vmem:[%s187] sm:$0x3]
      %v201 = vld [vmem:[%s191] sm:$0x3]
      %v202 = vld [vmem:[%s195] sm:$0x3]
      %vm203 = vcmask 64512
      %v205 = vsel %vm203, %v200, 0
      %v208 = vsel %vm203, %v201, 0
      %210 = vmatprep.subr.mxu0 0.0
      %211 = vmatpush1.xpose.msra.mxu0 %v208
      %212 = vmatprep.subr.mxu0 0.0
      %213 = vmatpush1.xpose.msra.mxu0 0.0
      %214 = vmatprep.subr.mxu0 0.0
      %215 = vmatpush1.xpose.msra.mxu0 0.0
      %216 = vmatprep.subr.mxu0 0.0
      %217 = vmatpush1.xpose.msra.mxu0 0.0
      %218 = vmatprep.subr.mxu0 0.0
      %219 = vmatpush1.xpose.msra.mxu0 0.0
      %220 = vmatprep.subr.mxu0 0.0
      %221 = vmatpush1.xpose.msra.mxu0 0.0
      %222 = vmatprep.subr.mxu0 0.0
      %223 = vmatpush1.xpose.msra.mxu0 0.0
      %224 = vmatprep.subr.mxu0 0.0
      %225 = vmatpush1.xpose.msra.mxu0 0.0
      %226 = vmatprep.subr.mxu0 0.0
      %227 = vmatpush1.xpose.msra.mxu0 0.0
      %228 = vmatprep.subr.mxu0 0.0
      %229 = vmatpush1.xpose.msra.mxu0 0.0
      %230 = vmatprep.subr.mxu0 0.0
      %231 = vmatpush1.xpose.msra.mxu0 0.0
      %232 = vmatprep.subr.mxu0 0.0
      %233 = vmatpush1.xpose.msra.mxu0 0.0
      %234 = vmatprep.subr.mxu0 0.0
      %235 = vmatpush1.xpose.msra.mxu0 0.0
      %236 = vmatprep.subr.mxu0 0.0
      %237 = vmatpush1.xpose.msra.mxu0 0.0
      %238 = vmatprep.subr.mxu0 0.0
      %239 = vmatpush1.xpose.msra.mxu0 0.0
      %240 = vmatprep.subr.mxu0 0.0
      %241 = vmatpush1.xpose.msra.mxu0 0.0
      %242 = vmatprep.subr.mxu0 0.0
      %243 = vmatpush1.xpose.msra.mxu0 0.0
      %244 = vmatprep.subr.mxu0 0.0
      %245 = vmatpush1.xpose.msra.mxu0 0.0
      %246 = vmatprep.subr.mxu0 0.0
      %247 = vmatpush1.xpose.msra.mxu0 0.0
      %248 = vmatprep.subr.mxu0 0.0
      %249 = vmatpush1.xpose.msra.mxu0 0.0
      %250 = vmatprep.subr.mxu0 0.0
      %251 = vmatpush1.xpose.msra.mxu0 0.0
      %252 = vmatprep.subr.mxu0 0.0
      %253 = vmatpush1.xpose.msra.mxu0 0.0
      %254 = vmatprep.subr.mxu0 0.0
      %255 = vmatpush1.xpose.msra.mxu0 0.0
      %256 = vmatprep.subr.mxu0 0.0
      %257 = vmatpush1.xpose.msra.mxu0 0.0
      %258 = vmatprep.subr.mxu0 0.0
      %259 = vmatpush1.xpose.msra.mxu0 0.0
      %260 = vmatprep.subr.mxu0 0.0
      %261 = vmatpush1.xpose.msra.mxu0 0.0
      %262 = vmatprep.subr.mxu0 0.0
      %263 = vmatpush1.xpose.msra.mxu0 0.0
      %264 = vmatprep.subr.mxu0 0.0
      %265 = vmatpush1.xpose.msra.mxu0 0.0
      %266 = vmatprep.subr.mxu0 0.0
      %267 = vmatpush1.xpose.msra.mxu0 0.0
      %268 = vmatprep.subr.mxu0 0.0
      %269 = vmatpush1.xpose.msra.mxu0 0.0
      %270 = vmatprep.subr.mxu0 0.0
      %271 = vmatpush1.xpose.msra.mxu0 0.0
      %272 = vmatprep.subr.mxu0 0.0
      %273 = vmatpush1.xpose.msra.mxu0 0.0
      %274 = vmatprep.mubr.f32.mxu0 0.0
      %275 = vmatmul.mubr.f32.gmra.mrb[0].mxu0 %v205
      %v276 = vpop.f32.mrb[0].mxu0
      %v277 = vadd.f32 0.0, %v276
      %v278 = vpop.f32.mrb[0].mxu0
      %279 = vdwg.mxu0
      %v280 = vmul.f32 %v277, 0.35355338
      %vm281 = vcmask 9216
      %v282 = vsel %vm281, %v280, -inf
      %283 = vmax.xlane.f32.xlu0 %v282
      %v284 = vpop.xlane.xlu0 %283
      %v285 = vsub.f32 %v280, %v284
      %v286 = vmul.f32 %v285, 1.442695
      %v287 = vpow.pop %v286
      %v288 = vsel %vm281, %v287, 0.0
      %289 = vadd.xlane.f32.xlu0 %v288
      %v290 = vpop.xlane.xlu0 %289
      %v291 = vrcp.pop %v290
      %v292 = vmul.f32 %v287, %v291
      %vm293 = vcmask 15360
      %v295 = vsel %vm293, %v292, 0
      %vm297 = vcmask 1041408
      %v299 = vsel %vm297, %v202, 0
      %301 = vmatprep.subr.mxu0 0.0
      %302 = vmatpush1.msra.mxu0 %v299
      %303 = vmatprep.subr.mxu0 0.0
      %304 = vmatpush1.msra.mxu0 0.0
      %305 = vmatprep.subr.mxu0 0.0
      %306 = vmatpush1.msra.mxu0 0.0
      %307 = vmatprep.subr.mxu0 0.0
      %308 = vmatpush1.msra.mxu0 0.0
      %309 = vmatprep.subr.mxu0 0.0
      %310 = vmatpush1.msra.mxu0 0.0
      %311 = vmatprep.subr.mxu0 0.0
      %312 = vmatpush1.msra.mxu0 0.0
      %313 = vmatprep.subr.mxu0 0.0
      %314 = vmatpush1.msra.mxu0 0.0
      %315 = vmatprep.subr.mxu0 0.0
      %316 = vmatpush1.msra.mxu0 0.0
      %317 = vmatprep.subr.mxu0 0.0
      %318 = vmatpush1.msra.mxu0 0.0
      %319 = vmatprep.subr.mxu0 0.0
      %320 = vmatpush1.msra.mxu0 0.0
      %321 = vmatprep.subr.mxu0 0.0
      %322 = vmatpush1.msra.mxu0 0.0
      %323 = vmatprep.subr.mxu0 0.0
      %324 = vmatpush1.msra.mxu0 0.0
      %325 = vmatprep.subr.mxu0 0.0
      %326 = vmatpush1.msra.mxu0 0.0
      %327 = vmatprep.subr.mxu0 0.0
      %328 = vmatpush1.msra.mxu0 0.0
      %329 = vmatprep.subr.mxu0 0.0
      %330 = vmatpush1.msra.mxu0 0.0
      %331 = vmatprep.subr.mxu0 0.0
      %332 = vmatpush1.msra.mxu0 0.0
      %333 = vmatprep.subr.mxu0 0.0
      %334 = vmatpush1.msra.mxu0 0.0
      %335 = vmatprep.subr.mxu0 0.0
      %336 = vmatpush1.msra.mxu0 0.0
      %337 = vmatprep.subr.mxu0 0.0
      %338 = vmatpush1.msra.mxu0 0.0
      %339 = vmatprep.subr.mxu0 0.0
      %340 = vmatpush1.msra.mxu0 0.0
      %341 = vmatprep.subr.mxu0 0.0
      %342 = vmatpush1.msra.mxu0 0.0
      %343 = vmatprep.subr.mxu0 0.0
      %344 = vmatpush1.msra.mxu0 0.0
      %345 = vmatprep.subr.mxu0 0.0
      %346 = vmatpush1.msra.mxu0 0.0
      %347 = vmatprep.subr.mxu0 0.0
      %348 = vmatpush1.msra.mxu0 0.0
      %349 = vmatprep.subr.mxu0 0.0
      %350 = vmatpush1.msra.mxu0 0.0
      %351 = vmatprep.subr.mxu0 0.0
      %352 = vmatpush1.msra.mxu0 0.0
      %353 = vmatprep.subr.mxu0 0.0
      %354 = vmatpush1.msra.mxu0 0.0
      %355 = vmatprep.subr.mxu0 0.0
      %356 = vmatpush1.msra.mxu0 0.0
      %357 = vmatprep.subr.mxu0 0.0
      %358 = vmatpush1.msra.mxu0 0.0
      %359 = vmatprep.subr.mxu0 0.0
      %360 = vmatpush1.msra.mxu0 0.0
      %361 = vmatprep.subr.mxu0 0.0
      %362 = vmatpush1.msra.mxu0 0.0
      %363 = vmatprep.subr.mxu0 0.0
      %364 = vmatpush1.msra.mxu0 0.0
      %365 = vmatprep.mubr.f32.mxu0 0.0
      %366 = vmatmul.mubr.f32.gmra.mrb[0].mxu0 %v295
      %v367 = vpop.f32.mrb[0].mxu0
      %v368 = vadd.f32 0.0, %v367
      %v369 = vpop.f32.mrb[0].mxu0
      %370 = vdwg.mxu0
      %vm371 = vcmask 58368
      %372 = vst.msk [vmem:[%s199] sm:$0x3] %vm371, %v368
      %p373 = scmp.lt.s32.totalorder %s14, 3
      %s374 = scalar_select %p373, %s14, 3
      %s375 = smul.addr %s374, 2
      %s376 = scalar_lea.vmem %s3, %s375
      // Predicated region
      $region33: #{closed_call.132} parent=31 // pred_check
        %p377 = pneg %p110
      $region34: #{closed_call.132} parent=31 // pred_check_branch
        %379 = sbr.rel (%p377) target = $region36
      $region35: #{closed_call.132} parent=31 // pred_region
        _
      $region36: #{closed_call.132} parent=31 // pred_fallthru
        _
    $region32: #{closed_call.132} parent=5 // pred_fallthru
      _
    %p380 = scmp.le.s32.totalorder 2, %s9
    // Predicated region
    $region37: #{closed_call.132} parent=5 // pred_check
      %p381 = pneg %p380
    $region38: #{closed_call.132} parent=5 // pred_check_branch
      %383 = sbr.rel (%p381) target = $region40
    $region39: #{closed_call.132} parent=5 // pred_region
      %s384 = ssub.s32 %s9, 2
      // Predicated region
      $region41: #{closed_call.132} parent=39 // pred_check
        %p385 = pneg %p116
      $region42: #{closed_call.132} parent=39 // pred_check_branch
        %387 = sbr.rel (%p385) target = $region44
      $region43: #{closed_call.132} parent=39 // pred_region
        %p388 = scmp.lt.s32.totalorder %s15, 3
        %s389 = scalar_select %p388, %s15, 3
        %s390 = smul.addr %s389, 2
        %s391 = scalar_lea.vmem %s3, %s390
      $region44: #{closed_call.132} parent=39 // pred_fallthru
        _
    $region40: #{closed_call.132} parent=5 // pred_fallthru
      _
  $region6: #{closed_call.132} parent=0 // loop_footer
    %s13 = sadd.s32 1, %s9
  $region7: #{closed_call.132} parent=0 // loop_footer_branch
    %8 = sbr.rel target = $region3
  $region8: #{closed_call.132} parent=0 // loop_exit
    _

// kernel: closed_call.139
$region0: #{closed_call.139}
  #allocation0 [shape = 'u32[]', space=smem, size = 0x4, offset = 0x4, fixed_abs, tag = 'smem constant byte address 0x4 - core index']
  #allocation1 [shape = 'u32[144,128]{1,0:T(1,128)}', space=vmem, size = 0x12000, scoped, tag = 'internal scratch']
  %s0 = inlined_call_operand.vmem [shape: f32[2,32], index: 0, kind: input, shape index: {}]
  %s1 = inlined_call_operand.vmem [shape: f32[2,32], index: 1, kind: input, shape index: {}]
  %s2 = inlined_call_operand.vmem [shape: f32[2,32], index: 2, kind: output, shape index: {}]
  %s3 = sld [smem:[#allocation0]]
  $region18: #{closed_call.139} parent=0
    _
  %s5 = ssub.s32 1, %s3
  %s6 = scalar_select 0, %s5, %s3
  // Predicated region
  $region2: #{closed_call.139} parent=0 // pred_check
    _
  $region3: #{closed_call.139} parent=0 // pred_check_branch
    %8 = sbr.rel (0) target = $region5
  $region4: #{closed_call.139} parent=0 // pred_region
    _
  $region5: #{closed_call.139} parent=0 // pred_fallthru
    _
  // Predicated region
  $region6: #{closed_call.139} parent=0 // pred_check
    _
  $region7: #{closed_call.139} parent=0 // pred_check_branch
    %10 = sbr.rel (0) target = $region9
  $region8: #{closed_call.139} parent=0 // pred_region
    _
  $region9: #{closed_call.139} parent=0 // pred_fallthru
    _
  %v11 = vld [vmem:[%s0] sm:$0x3]
  %v12 = vld [vmem:[%s1] sm:$0x3]
  %vm13 = vcmask 261120
  %v15 = vsel %vm13, %v11, 0
  %v18 = vsel %vm13, %v12, 0
  %20 = vmatprep.subr.mxu0 0.0
  %21 = vmatpush1.xpose.msra.mxu0 %v18
  %22 = vmatprep.subr.mxu0 0.0
  %23 = vmatpush1.xpose.msra.mxu0 0.0
  %24 = vmatprep.subr.mxu0 0.0
  %25 = vmatpush1.xpose.msra.mxu0 0.0
  %26 = vmatprep.subr.mxu0 0.0
  %27 = vmatpush1.xpose.msra.mxu0 0.0
  %28 = vmatprep.subr.mxu0 0.0
  %29 = vmatpush1.xpose.msra.mxu0 0.0
  %30 = vmatprep.subr.mxu0 0.0
  %31 = vmatpush1.xpose.msra.mxu0 0.0
  %32 = vmatprep.subr.mxu0 0.0
  %33 = vmatpush1.xpose.msra.mxu0 0.0
  %34 = vmatprep.subr.mxu0 0.0
  %35 = vmatpush1.xpose.msra.mxu0 0.0
  %36 = vmatprep.subr.mxu0 0.0
  %37 = vmatpush1.xpose.msra.mxu0 0.0
  %38 = vmatprep.subr.mxu0 0.0
  %39 = vmatpush1.xpose.msra.mxu0 0.0
  %40 = vmatprep.subr.mxu0 0.0
  %41 = vmatpush1.xpose.msra.mxu0 0.0
  %42 = vmatprep.subr.mxu0 0.0
  %43 = vmatpush1.xpose.msra.mxu0 0.0
  %44 = vmatprep.subr.mxu0 0.0
  %45 = vmatpush1.xpose.msra.mxu0 0.0
  %46 = vmatprep.subr.mxu0 0.0
  %47 = vmatpush1.xpose.msra.mxu0 0.0
  %48 = vmatprep.subr.mxu0 0.0
  %49 = vmatpush1.xpose.msra.mxu0 0.0
  %50 = vmatprep.subr.mxu0 0.0
  %51 = vmatpush1.xpose.msra.mxu0 0.0
  %52 = vmatprep.subr.mxu0 0.0
  %53 = vmatpush1.xpose.msra.mxu0 0.0
  %54 = vmatprep.subr.mxu0 0.0
  %55 = vmatpush1.xpose.msra.mxu0 0.0
  %56 = vmatprep.subr.mxu0 0.0
  %57 = vmatpush1.xpose.msra.mxu0 0.0
  %58 = vmatprep.subr.mxu0 0.0
  %59 = vmatpush1.xpose.msra.mxu0 0.0
  %60 = vmatprep.subr.mxu0 0.0
  %61 = vmatpush1.xpose.msra.mxu0 0.0
  %62 = vmatprep.subr.mxu0 0.0
  %63 = vmatpush1.xpose.msra.mxu0 0.0
  %64 = vmatprep.subr.mxu0 0.0
  %65 = vmatpush1.xpose.msra.mxu0 0.0
  %66 = vmatprep.subr.mxu0 0.0
  %67 = vmatpush1.xpose.msra.mxu0 0.0
  %68 = vmatprep.subr.mxu0 0.0
  %69 = vmatpush1.xpose.msra.mxu0 0.0
  %70 = vmatprep.subr.mxu0 0.0
  %71 = vmatpush1.xpose.msra.mxu0 0.0
  %72 = vmatprep.subr.mxu0 0.0
  %73 = vmatpush1.xpose.msra.mxu0 0.0
  %74 = vmatprep.subr.mxu0 0.0
  %75 = vmatpush1.xpose.msra.mxu0 0.0
  %76 = vmatprep.subr.mxu0 0.0
  %77 = vmatpush1.xpose.msra.mxu0 0.0
  %78 = vmatprep.subr.mxu0 0.0
  %79 = vmatpush1.xpose.msra.mxu0 0.0
  %80 = vmatprep.subr.mxu0 0.0
  %81 = vmatpush1.xpose.msra.mxu0 0.0
  %82 = vmatprep.subr.mxu0 0.0
  %83 = vmatpush1.xpose.msra.mxu0 0.0
  %84 = vmatprep.mubr.f32.mxu0 0.0
  %85 = vmatmul.mubr.f32.gmra.mrb[0].mxu0 %v15
  %v86 = vpop.f32.mrb[0].mxu0
  %v87 = vadd.f32 0.0, %v86
  %v88 = vpop.f32.mrb[0].mxu0
  %89 = vdwg.mxu0
  %vm90 = vcmask 9216
  %v91 = vsel %vm90, %v87, -inf
  %92 = vmax.xlane.f32.xlu0 %v91
  %v93 = vpop.xlane.xlu0 %92
  %v94 = vsub.f32 %v87, %v93
  %v95 = vmul.f32 %v94, 1.442695
  %v96 = vpow.pop %v95
  %v97 = vsel %vm90, %v96, 0.0
  %98 = vadd.xlane.f32.xlu0 %v97
  %v99 = vpop.xlane.xlu0 %98
  %v100 = vrcp.pop %v99
  %v101 = vmul.f32 %v96, %v100
  %vm102 = vcmask 15360
  %v104 = vsel %vm102, %v101, 0
  %vm106 = vcmask 1041408
  %v107 = vsel %vm106, %v12, 0
  %109 = vmatprep.subr.mxu0 0.0
  %110 = vmatpush1.msra.mxu0 %v107
  %111 = vmatprep.subr.mxu0 0.0
  %112 = vmatpush1.msra.mxu0 0.0
  %113 = vmatprep.subr.mxu0 0.0
  %114 = vmatpush1.msra.mxu0 0.0
  %115 = vmatprep.subr.mxu0 0.0
  %116 = vmatpush1.msra.mxu0 0.0
  %117 = vmatprep.subr.mxu0 0.0
  %118 = vmatpush1.msra.mxu0 0.0
  %119 = vmatprep.subr.mxu0 0.0
  %120 = vmatpush1.msra.mxu0 0.0
  %121 = vmatprep.subr.mxu0 0.0
  %122 = vmatpush1.msra.mxu0 0.0
  %123 = vmatprep.subr.mxu0 0.0
  %124 = vmatpush1.msra.mxu0 0.0
  %125 = vmatprep.subr.mxu0 0.0
  %126 = vmatpush1.msra.mxu0 0.0
  %127 = vmatprep.subr.mxu0 0.0
  %128 = vmatpush1.msra.mxu0 0.0
  %129 = vmatprep.subr.mxu0 0.0
  %130 = vmatpush1.msra.mxu0 0.0
  %131 = vmatprep.subr.mxu0 0.0
  %132 = vmatpush1.msra.mxu0 0.0
  %133 = vmatprep.subr.mxu0 0.0
  %134 = vmatpush1.msra.mxu0 0.0
  %135 = vmatprep.subr.mxu0 0.0
  %136 = vmatpush1.msra.mxu0 0.0
  %137 = vmatprep.subr.mxu0 0.0
  %138 = vmatpush1.msra.mxu0 0.0
  %139 = vmatprep.subr.mxu0 0.0
  %140 = vmatpush1.msra.mxu0 0.0
  %141 = vmatprep.subr.mxu0 0.0
  %142 = vmatpush1.msra.mxu0 0.0
  %143 = vmatprep.subr.mxu0 0.0
  %144 = vmatpush1.msra.mxu0 0.0
  %145 = vmatprep.subr.mxu0 0.0
  %146 = vmatpush1.msra.mxu0 0.0
  %147 = vmatprep.subr.mxu0 0.0
  %148 = vmatpush1.msra.mxu0 0.0
  %149 = vmatprep.subr.mxu0 0.0
  %150 = vmatpush1.msra.mxu0 0.0
  %151 = vmatprep.subr.mxu0 0.0
  %152 = vmatpush1.msra.mxu0 0.0
  %153 = vmatprep.subr.mxu0 0.0
  %154 = vmatpush1.msra.mxu0 0.0
  %155 = vmatprep.subr.mxu0 0.0
  %156 = vmatpush1.msra.mxu0 0.0
  %157 = vmatprep.subr.mxu0 0.0
  %158 = vmatpush1.msra.mxu0 0.0
  %159 = vmatprep.subr.mxu0 0.0
  %160 = vmatpush1.msra.mxu0 0.0
  %161 = vmatprep.subr.mxu0 0.0
  %162 = vmatpush1.msra.mxu0 0.0
  %163 = vmatprep.subr.mxu0 0.0
  %164 = vmatpush1.msra.mxu0 0.0
  %165 = vmatprep.subr.mxu0 0.0
  %166 = vmatpush1.msra.mxu0 0.0
  %167 = vmatprep.subr.mxu0 0.0
  %168 = vmatpush1.msra.mxu0 0.0
  %169 = vmatprep.subr.mxu0 0.0
  %170 = vmatpush1.msra.mxu0 0.0
  %171 = vmatprep.subr.mxu0 0.0
  %172 = vmatpush1.msra.mxu0 0.0
  %173 = vmatprep.mubr.f32.mxu0 0.0
  %174 = vmatmul.mubr.f32.gmra.mrb[0].mxu0 %v104
  %v175 = vpop.f32.mrb[0].mxu0
  %v176 = vadd.f32 0.0, %v175
  %v177 = vpop.f32.mrb[0].mxu0
  %178 = vdwg.mxu0
  %vm179 = vcmask 254976
  %180 = vst.msk [vmem:[%s2] sm:$0x3] %vm179, %v176
  // Predicated region
  $region10: #{closed_call.139} parent=0 // pred_check
    _
  $region11: #{closed_call.139} parent=0 // pred_check_branch
    %182 = sbr.rel (0) target = $region13
  $region12: #{closed_call.139} parent=0 // pred_region
    _
  $region13: #{closed_call.139} parent=0 // pred_fallthru
    _
  // Predicated region
  $region14: #{closed_call.139} parent=0 // pred_check
    _
  $region15: #{closed_call.139} parent=0 // pred_check_branch
    %184 = sbr.rel (0) target = $region17
  $region16: #{closed_call.139} parent=0 // pred_region
    _
  $region17: #{closed_call.139} parent=0 // pred_fallthru
    _

// kernel: closed_call.140
$region0: #{closed_call.140}
  #allocation0 [shape = 'u32[]', space=smem, size = 0x4, offset = 0x4, fixed_abs, tag = 'smem constant byte address 0x4 - core index']
  #allocation1 [shape = 'u32[144,128]{1,0:T(1,128)}', space=vmem, size = 0x12000, scoped, tag = 'internal scratch']
  %s0 = inlined_call_operand.vmem [shape: f32[2,96], index: 0, kind: input, shape index: {}]
  %s1 = inlined_call_operand.vmem [shape: f32[96,32], index: 1, kind: input, shape index: {}]
  %s2 = inlined_call_operand.vmem [shape: f32[1,32], index: 2, kind: input, shape index: {}]
  %s3 = inlined_call_operand.vmem [shape: f32[2,32], index: 3, kind: output, shape index: {}]
  %s4 = sld [smem:[#allocation0]]
  $region22: #{closed_call.140} parent=0
    _
  %s6 = ssub.s32 1, %s4
  %s7 = scalar_select 0, %s6, %s4
  // Predicated region
  $region2: #{closed_call.140} parent=0 // pred_check
    _
  $region3: #{closed_call.140} parent=0 // pred_check_branch
    %9 = sbr.rel (0) target = $region5
  $region4: #{closed_call.140} parent=0 // pred_region
    _
  $region5: #{closed_call.140} parent=0 // pred_fallthru
    _
  // Predicated region
  $region6: #{closed_call.140} parent=0 // pred_check
    _
  $region7: #{closed_call.140} parent=0 // pred_check_branch
    %11 = sbr.rel (0) target = $region9
  $region8: #{closed_call.140} parent=0 // pred_region
    _
  $region9: #{closed_call.140} parent=0 // pred_fallthru
    _
  // Predicated region
  $region10: #{closed_call.140} parent=0 // pred_check
    _
  $region11: #{closed_call.140} parent=0 // pred_check_branch
    %13 = sbr.rel (0) target = $region13
  $region12: #{closed_call.140} parent=0 // pred_region
    _
  $region13: #{closed_call.140} parent=0 // pred_fallthru
    _
  %v14 = vld [vmem:[%s0] sm:$0x3]
  %v15 = vld [vmem:[%s1] sm:$0xff]
  %v16 = vld [vmem:[%s1 + $0x8] sm:$0xff]
  %v17 = vld [vmem:[%s1 + $0x10] sm:$0xff]
  %v18 = vld [vmem:[%s1 + $0x18] sm:$0xff]
  %v19 = vld [vmem:[%s1 + $0x20] sm:$0xff]
  %v20 = vld [vmem:[%s1 + $0x28] sm:$0xff]
  %v21 = vld [vmem:[%s1 + $0x30] sm:$0xff]
  %v22 = vld [vmem:[%s1 + $0x38] sm:$0xff]
  %v23 = vld [vmem:[%s1 + $0x40] sm:$0xff]
  %v24 = vld [vmem:[%s1 + $0x48] sm:$0xff]
  %v25 = vld [vmem:[%s1 + $0x50] sm:$0xff]
  %v26 = vld [vmem:[%s1 + $0x58] sm:$0xff]
  %v27 = vld [vmem:[%s2] sm:$0x1]
  %v29 = vlaneseq
  %v30 = vshrl.u32 %v29, 7
  %v31 = vsub.s32 0, %v30
  %v32 = vrot.slane %v27, %v31
  %vm34 = vcmask 785408
  %v36 = vsel %vm34, %v14, 0
  %38 = vmatprep.subr.mxu0 0.0
  %39 = vmatpush1.msra.mxu0 %v15
  %40 = vmatprep.subr.mxu0 0.0
  %41 = vmatpush1.msra.mxu0 %v16
  %42 = vmatprep.subr.mxu0 0.0
  %43 = vmatpush1.msra.mxu0 %v17
  %44 = vmatprep.subr.mxu0 0.0
  %45 = vmatpush1.msra.mxu0 %v18
  %46 = vmatprep.subr.mxu0 0.0
  %47 = vmatpush1.msra.mxu0 %v19
  %48 = vmatprep.subr.mxu0 0.0
  %49 = vmatpush1.msra.mxu0 %v20
  %50 = vmatprep.subr.mxu0 0.0
  %51 = vmatpush1.msra.mxu0 %v21
  %52 = vmatprep.subr.mxu0 0.0
  %53 = vmatpush1.msra.mxu0 %v22
  %54 = vmatprep.subr.mxu0 0.0
  %55 = vmatpush1.msra.mxu0 %v23
  %56 = vmatprep.subr.mxu0 0.0
  %57 = vmatpush1.msra.mxu0 %v24
  %58 = vmatprep.subr.mxu0 0.0
  %59 = vmatpush1.msra.mxu0 %v25
  %60 = vmatprep.subr.mxu0 0.0
  %61 = vmatpush1.msra.mxu0 %v26
  %62 = vmatprep.subr.mxu0 0.0
  %63 = vmatpush1.msra.mxu0 0.0
  %64 = vmatprep.subr.mxu0 0.0
  %65 = vmatpush1.msra.mxu0 0.0
  %66 = vmatprep.subr.mxu0 0.0
  %67 = vmatpush1.msra.mxu0 0.0
  %68 = vmatprep.subr.mxu0 0.0
  %69 = vmatpush1.msra.mxu0 0.0
  %70 = vmatprep.subr.mxu0 0.0
  %71 = vmatpush1.msra.mxu0 0.0
  %72 = vmatprep.subr.mxu0 0.0
  %73 = vmatpush1.msra.mxu0 0.0
  %74 = vmatprep.subr.mxu0 0.0
  %75 = vmatpush1.msra.mxu0 0.0
  %76 = vmatprep.subr.mxu0 0.0
  %77 = vmatpush1.msra.mxu0 0.0
  %78 = vmatprep.subr.mxu0 0.0
  %79 = vmatpush1.msra.mxu0 0.0
  %80 = vmatprep.subr.mxu0 0.0
  %81 = vmatpush1.msra.mxu0 0.0
  %82 = vmatprep.subr.mxu0 0.0
  %83 = vmatpush1.msra.mxu0 0.0
  %84 = vmatprep.subr.mxu0 0.0
  %85 = vmatpush1.msra.mxu0 0.0
  %86 = vmatprep.subr.mxu0 0.0
  %87 = vmatpush1.msra.mxu0 0.0
  %88 = vmatprep.subr.mxu0 0.0
  %89 = vmatpush1.msra.mxu0 0.0
  %90 = vmatprep.subr.mxu0 0.0
  %91 = vmatpush1.msra.mxu0 0.0
  %92 = vmatprep.subr.mxu0 0.0
  %93 = vmatpush1.msra.mxu0 0.0
  %94 = vmatprep.subr.mxu0 0.0
  %95 = vmatpush1.msra.mxu0 0.0
  %96 = vmatprep.subr.mxu0 0.0
  %97 = vmatpush1.msra.mxu0 0.0
  %98 = vmatprep.subr.mxu0 0.0
  %99 = vmatpush1.msra.mxu0 0.0
  %100 = vmatprep.subr.mxu0 0.0
  %101 = vmatpush1.msra.mxu0 0.0
  %102 = vmatprep.mubr.f32.mxu0 0.0
  %103 = vmatmul.mubr.f32.gmra.mrb[0].mxu0 %v36
  %v104 = vpop.f32.mrb[0].mxu0
  %v105 = vadd.f32 %v32, %v104
  %v106 = vpop.f32.mrb[0].mxu0
  %107 = vdwg.mxu0
  %vm108 = vcmask 254976
  %109 = vst.msk [vmem:[%s3] sm:$0x3] %vm108, %v105
  // Predicated region
  $region14: #{closed_call.140} parent=0 // pred_check
    _
  $region15: #{closed_call.140} parent=0 // pred_check_branch
    %111 = sbr.rel (0) target = $region17
  $region16: #{closed_call.140} parent=0 // pred_region
    _
  $region17: #{closed_call.140} parent=0 // pred_fallthru
    _
  // Predicated region
  $region18: #{closed_call.140} parent=0 // pred_check
    _
  $region19: #{closed_call.140} parent=0 // pred_check_branch
    %113 = sbr.rel (0) target = $region21
  $region20: #{closed_call.140} parent=0 // pred_region
    _
  $region21: #{closed_call.140} parent=0 // pred_fallthru
    _

// kernel: hlsn_forward.11
$region0: #{hlsn_forward.11}
  #allocation0 [shape = 'u32[]', space=smem, size = 0x4, offset = 0x4, fixed_abs, tag = 'smem constant byte address 0x4 - core index']
  #allocation1 [shape = 'u32[144,128]{1,0:T(1,128)}', space=vmem, size = 0x12000, scoped, tag = 'internal scratch']
  %s0 = inlined_call_operand.vmem [shape: f32[2,32], index: 0, kind: input, shape index: {}]
  %s1 = inlined_call_operand.vmem [shape: f32[32,4], index: 1, kind: input, shape index: {}]
  %s2 = inlined_call_operand.vmem [shape: f32[1,4], index: 2, kind: input, shape index: {}]
  %s3 = inlined_call_operand.vmem [shape: f32[2,4], index: 3, kind: output, shape index: {}]
  %s4 = sld [smem:[#allocation0]]
  $region22: #{hlsn_forward.11} parent=0
    _
  %s6 = ssub.s32 1, %s4
  %s7 = scalar_select 0, %s6, %s4
  // Predicated region
  $region2: #{hlsn_forward.11} parent=0 // pred_check
    _
  $region3: #{hlsn_forward.11} parent=0 // pred_check_branch
    %9 = sbr.rel (0) target = $region5
  $region4: #{hlsn_forward.11} parent=0 // pred_region
    _
  $region5: #{hlsn_forward.11} parent=0 // pred_fallthru
    _
  // Predicated region
  $region6: #{hlsn_forward.11} parent=0 // pred_check
    _
  $region7: #{hlsn_forward.11} parent=0 // pred_check_branch
    %11 = sbr.rel (0) target = $region9
  $region8: #{hlsn_forward.11} parent=0 // pred_region
    _
  $region9: #{hlsn_forward.11} parent=0 // pred_fallthru
    _
  // Predicated region
  $region10: #{hlsn_forward.11} parent=0 // pred_check
    _
  $region11: #{hlsn_forward.11} parent=0 // pred_check_branch
    %13 = sbr.rel (0) target = $region13
  $region12: #{hlsn_forward.11} parent=0 // pred_region
    _
  $region13: #{hlsn_forward.11} parent=0 // pred_fallthru
    _
  %v14 = vld [vmem:[%s0] sm:$0x3]
  %v15 = vld [vmem:[%s1] sm:$0xff]
  %v16 = vld [vmem:[%s1 + $0x8] sm:$0xff]
  %v17 = vld [vmem:[%s1 + $0x10] sm:$0xff]
  %v18 = vld [vmem:[%s1 + $0x18] sm:$0xff]
  %v19 = vld [vmem:[%s2] sm:$0x1]
  %v21 = vlaneseq
  %v22 = vshrl.u32 %v21, 7
  %v23 = vsub.s32 0, %v22
  %v24 = vrot.slane %v19, %v23
  %vm26 = vcmask 261120
  %v28 = vsel %vm26, %v14, 0
  %30 = vmatprep.subr.mxu0 0.0
  %31 = vmatpush1.msra.mxu0 %v15
  %32 = vmatprep.subr.mxu0 0.0
  %33 = vmatpush1.msra.mxu0 %v16
  %34 = vmatprep.subr.mxu0 0.0
  %35 = vmatpush1.msra.mxu0 %v17
  %36 = vmatprep.subr.mxu0 0.0
  %37 = vmatpush1.msra.mxu0 %v18
  %38 = vmatprep.subr.mxu0 0.0
  %39 = vmatpush1.msra.mxu0 0.0
  %40 = vmatprep.subr.mxu0 0.0
  %41 = vmatpush1.msra.mxu0 0.0
  %42 = vmatprep.subr.mxu0 0.0
  %43 = vmatpush1.msra.mxu0 0.0
  %44 = vmatprep.subr.mxu0 0.0
  %45 = vmatpush1.msra.mxu0 0.0
  %46 = vmatprep.subr.mxu0 0.0
  %47 = vmatpush1.msra.mxu0 0.0
  %48 = vmatprep.subr.mxu0 0.0
  %49 = vmatpush1.msra.mxu0 0.0
  %50 = vmatprep.subr.mxu0 0.0
  %51 = vmatpush1.msra.mxu0 0.0
  %52 = vmatprep.subr.mxu0 0.0
  %53 = vmatpush1.msra.mxu0 0.0
  %54 = vmatprep.subr.mxu0 0.0
  %55 = vmatpush1.msra.mxu0 0.0
  %56 = vmatprep.subr.mxu0 0.0
  %57 = vmatpush1.msra.mxu0 0.0
  %58 = vmatprep.subr.mxu0 0.0
  %59 = vmatpush1.msra.mxu0 0.0
  %60 = vmatprep.subr.mxu0 0.0
  %61 = vmatpush1.msra.mxu0 0.0
  %62 = vmatprep.subr.mxu0 0.0
  %63 = vmatpush1.msra.mxu0 0.0
  %64 = vmatprep.subr.mxu0 0.0
  %65 = vmatpush1.msra.mxu0 0.0
  %66 = vmatprep.subr.mxu0 0.0
  %67 = vmatpush1.msra.mxu0 0.0
  %68 = vmatprep.subr.mxu0 0.0
  %69 = vmatpush1.msra.mxu0 0.0
  %70 = vmatprep.subr.mxu0 0.0
  %71 = vmatpush1.msra.mxu0 0.0
  %72 = vmatprep.subr.mxu0 0.0
  %73 = vmatpush1.msra.mxu0 0.0
  %74 = vmatprep.subr.mxu0 0.0
  %75 = vmatpush1.msra.mxu0 0.0
  %76 = vmatprep.subr.mxu0 0.0
  %77 = vmatpush1.msra.mxu0 0.0
  %78 = vmatprep.subr.mxu0 0.0
  %79 = vmatpush1.msra.mxu0 0.0
  %80 = vmatprep.subr.mxu0 0.0
  %81 = vmatpush1.msra.mxu0 0.0
  %82 = vmatprep.subr.mxu0 0.0
  %83 = vmatpush1.msra.mxu0 0.0
  %84 = vmatprep.subr.mxu0 0.0
  %85 = vmatpush1.msra.mxu0 0.0
  %86 = vmatprep.subr.mxu0 0.0
  %87 = vmatpush1.msra.mxu0 0.0
  %88 = vmatprep.subr.mxu0 0.0
  %89 = vmatpush1.msra.mxu0 0.0
  %90 = vmatprep.subr.mxu0 0.0
  %91 = vmatpush1.msra.mxu0 0.0
  %92 = vmatprep.subr.mxu0 0.0
  %93 = vmatpush1.msra.mxu0 0.0
  %94 = vmatprep.mubr.f32.mxu0 0.0
  %95 = vmatmul.mubr.f32.gmra.mrb[0].mxu0 %v28
  %v96 = vpop.f32.mrb[0].mxu0
  %v97 = vadd.f32 %v24, %v96
  %v98 = vpop.f32.mrb[0].mxu0
  %99 = vdwg.mxu0
  %vm100 = vcmask 25600
  %101 = vst.msk [vmem:[%s3] sm:$0x3] %vm100, %v97
  // Predicated region
  $region14: #{hlsn_forward.11} parent=0 // pred_check
    _
  $region15: #{hlsn_forward.11} parent=0 // pred_check_branch
    %103 = sbr.rel (0) target = $region17
  $region16: #{hlsn_forward.11} parent=0 // pred_region
    _
  $region17: #{hlsn_forward.11} parent=0 // pred_fallthru
    _
  // Predicated region
  $region18: #{hlsn_forward.11} parent=0 // pred_check
    _
  $region19: #{hlsn_forward.11} parent=0 // pred_check_branch
    %105 = sbr.rel (0) target = $region21
  $region20: #{hlsn_forward.11} parent=0 // pred_region
    _
  $region21: #{hlsn_forward.11} parent=0 // pred_fallthru
    _

// kernel: hlsn_forward.13
$region0: #{hlsn_forward.13}
  #allocation0 [shape = 'u32[]', space=smem, size = 0x4, offset = 0x4, fixed_abs, tag = 'smem constant byte address 0x4 - core index']
  #allocation1 [shape = 'u32[144,128]{1,0:T(1,128)}', space=vmem, size = 0x12000, scoped, tag = 'internal scratch']
  #allocation2 [shape = 'f32[1,1]{1,0:T(1,128)S(1)}', space=vmem, size = 0x200, scoped, tag = 'scoped memory for hlsn_forward.13']
  %s0 = inlined_call_operand.vmem [shape: f32[2,4], index: 0, kind: input, shape index: {}]
  %s1 = inlined_call_operand.vmem [shape: f32[2,4], index: 1, kind: input, shape index: {}]
  %s2 = inlined_call_operand.<no memory space> [shape: f32[1,1], index: 2, kind: input, shape index: {}]
  %s3 = inlined_call_operand.hbm [shape: f32[2,4], index: 3, kind: output, shape index: {}]
  %s4 = sld [smem:[#allocation0]]
  $region22: #{hlsn_forward.13} parent=0
    _
  %s6 = ssub.s32 1, %s4
  %s7 = scalar_select 0, %s6, %s4
  %v8 = vstv %s2
  %9 = vst [vmem:[#allocation2] sm:$0x1] %v8
  $region1: #{hlsn_forward.13} parent=0
    #allocation3 [shape = 'u8[1024]{0}', space=vmem, size = 0x400, scoped, tag = 'output window, operand 0, single buffered']
    #allocation4 [shape = 's32[1]{0}', space=sflag, size = 0x4, scoped, tag = 'scoped memory for hlsn_forward.13']
    %10 = vsyncpa [#allocation4], 0
    // Predicated region
    $region2: #{hlsn_forward.13} parent=1 // pred_check
      _
    $region3: #{hlsn_forward.13} parent=1 // pred_check_branch
      %12 = sbr.rel (0) target = $region5
    $region4: #{hlsn_forward.13} parent=1 // pred_region
      _
    $region5: #{hlsn_forward.13} parent=1 // pred_fallthru
      _
    // Predicated region
    $region6: #{hlsn_forward.13} parent=1 // pred_check
      _
    $region7: #{hlsn_forward.13} parent=1 // pred_check_branch
      %14 = sbr.rel (0) target = $region9
    $region8: #{hlsn_forward.13} parent=1 // pred_region
      _
    $region9: #{hlsn_forward.13} parent=1 // pred_fallthru
      _
    // Predicated region
    $region10: #{hlsn_forward.13} parent=1 // pred_check
      _
    $region11: #{hlsn_forward.13} parent=1 // pred_check_branch
      %16 = sbr.rel (0) target = $region13
    $region12: #{hlsn_forward.13} parent=1 // pred_region
      _
    $region13: #{hlsn_forward.13} parent=1 // pred_fallthru
      _
    %v17 = vld [vmem:[%s0] sm:$0x3]
    %v18 = vld [vmem:[%s1] sm:$0x3]
    %v19 = vld [vmem:[#allocation2] sm:$0x1]
    %v21 = vlaneseq
    %v22 = vshrl.u32 %v21, 7
    %v23 = vsub.s32 0, %v22
    %v24 = vrot.slane %v19, %v23
    %25 = vset.pattern.permute.xlu0 0
    %26 = vperm.xlu0 %25, %v24
    %v27 = vpop.permute.xlu0 %26
    %v29 = vmul.f32 %v18, %v27
    %v30 = vadd.f32 %v17, %v29
    %vm31 = vcmask 25600
    %v32 = vsel %vm31, %v30, -inf
    %33 = vmax.xlane.f32.xlu0 %v32
    %v34 = vpop.xlane.xlu0 %33
    %v35 = vsub.f32 %v30, %v34
    %v36 = vmul.f32 %v35, 1.442695
    %v37 = vpow.pop %v36
    %v38 = vsel %vm31, %v37, 0.0
    %39 = vadd.xlane.f32.xlu0 %v38
    %v40 = vpop.xlane.xlu0 %39
    %v41 = vrcp.pop %v40
    %v42 = vmul.f32 %v37, %v41
    %43 = vst.msk [vmem:[#allocation3] sm:$0x3] %vm31, %v42
    // Predicated region
    $region14: #{hlsn_forward.13} parent=1 // pred_check
      _
    $region15: #{hlsn_forward.13} parent=1 // pred_check_branch
      %45 = sbr.rel (0) target = $region17
    $region16: #{hlsn_forward.13} parent=1 // pred_region
      %s47 = ssub.s32 32, 32
      %48 = vsyncadd [#allocation4], %s47
      %s50 = sshll.u32 [#allocation3], 4
      %s51 = int_to_ptr.vmem [resolvable:$true] %s50
      %53 = dma.vmem_to_hbm [thread:$0]  %s51, 32, %s3, [#allocation4]
    $region17: #{hlsn_forward.13} parent=1 // pred_fallthru
      _
    // Predicated region
    $region18: #{hlsn_forward.13} parent=1 // pred_check
      _
    $region19: #{hlsn_forward.13} parent=1 // pred_check_branch
      %55 = sbr.rel (0) target = $region21
    $region20: #{hlsn_forward.13} parent=1 // pred_region
      %56 = dma.done [#allocation4], 32
    $region21: #{hlsn_forward.13} parent=1 // pred_fallthru
      _
    %57 = vsyncpa [#allocation4], 1

</llo_original>
